<compile_context>
chip_gen: v7x
topology: tpu7x:2x2x1
jax: 0.10.0
libtpu: 0.0.40
codegen_flags: <defaults>
</compile_context>

<pallas_src>
import jax
import jax.numpy as jnp
from jax import lax
from jax.experimental import pallas as pl
from jax.experimental.pallas import tpu as pltpu


def _interleave_gates(wf, wb, H):
    """(..., 4H) fwd & bwd tensors (gate order i,f,g,o) -> (..., 8H) with gate-major
    interleave [i_f, i_b, f_f, f_b, g_f, g_b, o_f, o_b]."""
    lead = wf.shape[:-1]
    wf4 = wf.reshape(lead + (4, H))
    wb4 = wb.reshape(lead + (4, H))
    return jnp.stack([wf4, wb4], axis=-2).reshape(lead + (8 * H,))


def bilstm_fc_kernel(emb_ref, wih_ref, b_ref, whh_ref, fcw_ref, fcb_ref,
                     out_ref, xg_ref):
    """Fused bidirectional LSTM recurrence + final FC.

    emb_ref: (seq, Bp, 2E)  f32, [..., :E] = x_t, [..., E:] = x_{seq-1-t}
    wih_ref: (2E, 8H)       block-structured input->gate weights (both directions,
                            interleaved gate columns, fwd rows 0:E, bwd rows E:2E)
    b_ref:   (1, 8H)        interleaved (b_ih + b_hh) for both directions
    whh_ref: (2H, 8H)       block-diagonal hidden->gate weights (interleaved cols)
    fcw_ref: (2H, O_pad)    fc weight, rows 0:H fwd / H:2H bwd, cols zero-padded
    fcb_ref: (1, O_pad)
    out_ref: (Bp, O_pad)
    xg_ref:  (seq, Bp, 8H)  VMEM scratch for the hoisted input projection
    """
    seq, Bp, E2 = emb_ref.shape
    H2 = whh_ref.shape[0]          # 2H  ([fwd | bwd] hidden width)
    G = whh_ref.shape[1]           # 8H  (interleaved gates, both directions)

    # (1) Hoisted input projection for both directions, bias folded in:
    #     one wide MXU matmul, written once to VMEM scratch.
    xg = (jnp.dot(emb_ref[...].reshape(seq * Bp, E2), wih_ref[...],
                  preferred_element_type=jnp.float32)
          + b_ref[...])
    xg_ref[...] = xg.reshape(seq, Bp, G)

    whh = whh_ref[...]             # hoisted out of the recurrence

    def step(t, carry):
        h, c = carry               # (Bp, 2H): [:, :H] = fwd, [:, H:] = bwd
        # Single 256-wide block-diagonal recurrent push for both directions.
        gates = xg_ref[t] + jnp.dot(h, whh, preferred_element_type=jnp.float32)
        i = jax.nn.sigmoid(gates[:, 0 * H2:1 * H2])
        f = jax.nn.sigmoid(gates[:, 1 * H2:2 * H2])
        g = jnp.tanh(gates[:, 2 * H2:3 * H2])
        o = jax.nn.sigmoid(gates[:, 3 * H2:4 * H2])
        c_new = f * c + i * g
        h_new = o * jnp.tanh(c_new)
        return h_new, c_new

    h = jnp.zeros((Bp, H2), jnp.float32)
    c = jnp.zeros((Bp, H2), jnp.float32)
    # Fully unrolled recurrence (seq is static & small) -> straight-line code,
    # static scratch indices.  For long sequences use
    # lax.fori_loop(0, seq, step, (h, c), unroll=4) instead.
    for t in range(seq):
        h, c = step(t, (h, c))

    # h == [final fwd hidden | final bwd hidden]  (PyTorch hidden[-2], hidden[-1]).
    out_ref[...] = (jnp.dot(h, fcw_ref[...], preferred_element_type=jnp.float32)
                    + fcb_ref[...])


def pack_params(params):
    """Pack raw (PyTorch-style) params into the fused/interleaved kernel layout."""
    E, H4 = params["wih_f"].shape
    H = params["whh_f"].shape[0]
    O = params["fc_b"].shape[-1]
    O_pad = ((O + 127) // 128) * 128

    zE = jnp.zeros((E, H4), jnp.float32)
    zH = jnp.zeros((H, H4), jnp.float32)

    # rows 0:E act on x_t (fwd gate columns), rows E:2E act on x_{seq-1-t} (bwd cols)
    wih_bd = jnp.concatenate(
        [_interleave_gates(params["wih_f"], zE, H),
         _interleave_gates(zE, params["wih_b"], H)], axis=0)          # (2E, 8H)
    # rows 0:H act on h_fwd, rows H:2H act on h_bwd (block diagonal)
    whh_bd = jnp.concatenate(
        [_interleave_gates(params["whh_f"], zH, H),
         _interleave_gates(zH, params["whh_b"], H)], axis=0)          # (2H, 8H)
    b_cat = _interleave_gates(params["b_f"], params["b_b"], H)        # (1, 8H)

    fc_w = jnp.concatenate([params["fc_wf"], params["fc_wb"]], axis=0)  # (2H, O)
    fc_w = jnp.pad(fc_w, ((0, 0), (0, O_pad - O)))                      # lane-dense
    fc_b = jnp.pad(params["fc_b"], ((0, 0), (0, O_pad - O)))

    return {"wih_bd": wih_bd, "whh_bd": whh_bd, "b_cat": b_cat,
            "fc_w": fc_w, "fc_b": fc_b, "O": O, "O_pad": O_pad, "H": H}


def lstm_forward(x_ids, params):
    """x_ids: (seq, batch) int32 token ids. Returns (batch, output_dim) f32."""
    packed = pack_params(params)

    # Embedding lookup is gather glue — done in plain JAX.
    # TODO(synk): for production sizes, fuse the gather into the kernel via
    # PrefetchScalarGridSpec + pl.Element row-gather and stream seq-chunks.
    embedded = jnp.take(params["emb_table"], x_ids, axis=0)  # (seq, B, E) f32
    seq, B, E = embedded.shape

    # Pad batch to a sublane multiple so every vreg row is used.
    Bp = ((B + 7) // 8) * 8
    emb = jnp.pad(embedded, ((0, 0), (0, Bp - B), (0, 0)))
    # Concatenate the forward stream with its time-reversal so the fused
    # recurrence reads a single scratch row per step.
    emb_cat = jnp.concatenate([emb, emb[::-1]], axis=-1)      # (seq, Bp, 2E)

    G = 8 * packed["H"]
    O_pad = packed["O_pad"]

    vmem = pl.BlockSpec(memory_space=pltpu.MemorySpace.VMEM)
    out = pl.pallas_call(
        bilstm_fc_kernel,
        out_shape=jax.ShapeDtypeStruct((Bp, O_pad), jnp.float32),
        in_specs=[vmem] * 6,
        out_specs=vmem,
        scratch_shapes=[pltpu.VMEM((seq, Bp, G), jnp.float32)],
    )(emb_cat, packed["wih_bd"], packed["b_cat"], packed["whh_bd"],
      packed["fc_w"], packed["fc_b"])

    return out[:B, :packed["O"]]


def make_params(key, vocab_size, emb_dim, hidden_dim, output_dim):
    """Deterministic synthetic parameters (PyTorch-style uniform init)."""
    ks = jax.random.split(key, 12)
    H = hidden_dim
    bound = 1.0 / jnp.sqrt(jnp.float32(H))

    def u(k, shape):
        return jax.random.uniform(k, shape, jnp.float32, -bound, bound)

    # PyTorch stores weight_ih as (4H, E); we keep it transposed as (E, 4H),
    # gate order i, f, g, o along the columns.
    return {
        "emb_table": jax.random.normal(ks[0], (vocab_size, emb_dim), jnp.float32),
        "wih_f": u(ks[1], (emb_dim, 4 * H)),
        "whh_f": u(ks[2], (H, 4 * H)),
        "b_f": u(ks[3], (1, 4 * H)) + u(ks[4], (1, 4 * H)),   # b_ih + b_hh
        "wih_b": u(ks[5], (emb_dim, 4 * H)),
        "whh_b": u(ks[6], (H, 4 * H)),
        "b_b": u(ks[7], (1, 4 * H)) + u(ks[8], (1, 4 * H)),
        # fc: Linear(2H, O); weight split into fwd / bwd row-halves.
        "fc_wf": u(ks[9], (H, output_dim)),
        "fc_wb": u(ks[10], (H, output_dim)),
        "fc_b": u(ks[11], (1, output_dim)),
    }


def lstm_forward_ref(x_ids, params):
    """Pure-JAX reference with identical semantics (correctness check)."""
    embedded = jnp.take(params["emb_table"], x_ids, axis=0)
    seq, batch, _ = embedded.shape
    H = params["whh_f"].shape[0]

    def cell(x_t, h, c, wih, whh, b):
        gates = x_t @ wih + h @ whh + b
        i = jax.nn.sigmoid(gates[:, 0:H])
        f = jax.nn.sigmoid(gates[:, H:2 * H])
        g = jnp.tanh(gates[:, 2 * H:3 * H])
        o = jax.nn.sigmoid(gates[:, 3 * H:4 * H])
        c = f * c + i * g
        return o * jnp.tanh(c), c

    h = c = jnp.zeros((batch, H), jnp.float32)
    for t in range(seq):
        h, c = cell(embedded[t], h, c, params["wih_f"], params["whh_f"], params["b_f"])
    h_fwd = h
    h = c = jnp.zeros((batch, H), jnp.float32)
    for t in range(seq - 1, -1, -1):
        h, c = cell(embedded[t], h, c, params["wih_b"], params["whh_b"], params["b_b"])
    h_bwd = h
    return h_fwd @ params["fc_wf"] + h_bwd @ params["fc_wb"] + params["fc_b"]


if __name__ == "__main__":
    vocab_size, emb_dim, hidden_dim, output_dim = 50, 32, 32, 4
    seq_len, batch = 8, 4

    key = jax.random.PRNGKey(0)
    k_ids, k_params = jax.random.split(key)

    x_ids = jax.random.randint(k_ids, (seq_len, batch), 0, vocab_size, dtype=jnp.int32)
    params = make_params(k_params, vocab_size, emb_dim, hidden_dim, output_dim)

    out = jax.block_until_ready(lstm_forward(x_ids, params))
    ref = jax.block_until_ready(lstm_forward_ref(x_ids, params))

    assert out.shape == (batch, output_dim)
    assert jnp.allclose(out, ref, atol=1e-4, rtol=1e-4)
    print("KERNEL_OK")
</pallas_src>

<mosaic_0001>
module attributes {stable_mosaic.version = 11 : i64} {
  func.func @bilstm_fc_kernel(%arg0: memref<8x8x64xf32, #tpu.memory_space<vmem>>, %arg1: memref<64x256xf32, #tpu.memory_space<vmem>>, %arg2: memref<1x256xf32, #tpu.memory_space<vmem>>, %arg3: memref<64x256xf32, #tpu.memory_space<vmem>>, %arg4: memref<64x128xf32, #tpu.memory_space<vmem>>, %arg5: memref<1x128xf32, #tpu.memory_space<vmem>>, %arg6: memref<8x128xf32, #tpu.memory_space<vmem>>, %arg7: memref<8x8x256xf32, #tpu.memory_space<vmem>>) attributes {dimension_semantics = [], scalar_prefetch = 0 : i64, scratch_operands = 1 : i64, tpu.core_type = #tpu.core_type<tc>} {
    %c0 = arith.constant 0 : index
    %c0_0 = arith.constant 0 : index
    %c0_1 = arith.constant 0 : index
    %0 = vector.load %arg0[%c0, %c0_0, %c0_1] : memref<8x8x64xf32, #tpu.memory_space<vmem>>, vector<8x8x64xf32>
    %1 = vector.shape_cast %0 : vector<8x8x64xf32> to vector<64x64xf32>
    %c0_2 = arith.constant 0 : index
    %c0_3 = arith.constant 0 : index
    %2 = vector.load %arg1[%c0_2, %c0_3] : memref<64x256xf32, #tpu.memory_space<vmem>>, vector<64x256xf32>
    %cst = arith.constant dense<0.000000e+00> : vector<64x256xf32>
    %3 = tpu.matmul %1, %2, %cst {dimension_numbers = #tpu.dot_dimension_numbers<[1], [0], [0], [1], [0, 0, 1, 1], [], []>} : vector<64x64xf32>, vector<64x256xf32>, vector<64x256xf32> -> vector<64x256xf32>
    %c0_4 = arith.constant 0 : index
    %c0_5 = arith.constant 0 : index
    %4 = vector.load %arg2[%c0_4, %c0_5] : memref<1x256xf32, #tpu.memory_space<vmem>>, vector<1x256xf32>
    %5 = vector.broadcast %4 : vector<1x256xf32> to vector<64x256xf32>
    %6 = arith.addf %3, %5 : vector<64x256xf32>
    %7 = vector.shape_cast %6 : vector<64x256xf32> to vector<8x8x256xf32>
    %c0_6 = arith.constant 0 : index
    %c0_7 = arith.constant 0 : index
    %c0_8 = arith.constant 0 : index
    %8 = vector.load %arg7[%c0_6, %c0_7, %c0_8] : memref<8x8x256xf32, #tpu.memory_space<vmem>>, vector<8x8x256xf32>
    tpu.vector_store %arg7[%c0_6, %c0_7, %c0_8], %7 {strides = array<i32>} : memref<8x8x256xf32, #tpu.memory_space<vmem>>, vector<8x8x256xf32>,
    %c0_9 = arith.constant 0 : index
    %c0_10 = arith.constant 0 : index
    %9 = vector.load %arg3[%c0_9, %c0_10] : memref<64x256xf32, #tpu.memory_space<vmem>>, vector<64x256xf32>
    %cst_11 = arith.constant 0.000000e+00 : f32
    %10 = vector.broadcast %cst_11 : f32 to vector<8x64xf32>
    %cst_12 = arith.constant 0.000000e+00 : f32
    %11 = vector.broadcast %cst_12 : f32 to vector<8x64xf32>
    %c0_13 = arith.constant 0 : index
    %c0_14 = arith.constant 0 : index
    %c0_15 = arith.constant 0 : index
    %12 = vector.load %arg7[%c0_13, %c0_14, %c0_15] : memref<8x8x256xf32, #tpu.memory_space<vmem>>, vector<1x8x256xf32>
    %13 = vector.shape_cast %12 : vector<1x8x256xf32> to vector<8x256xf32>
    %cst_16 = arith.constant dense<0.000000e+00> : vector<8x256xf32>
    %14 = tpu.matmul %10, %9, %cst_16 {dimension_numbers = #tpu.dot_dimension_numbers<[1], [0], [0], [1], [0, 0, 1, 1], [], []>} : vector<8x64xf32>, vector<64x256xf32>, vector<8x256xf32> -> vector<8x256xf32>
    %15 = arith.addf %13, %14 : vector<8x256xf32>
    %16 = vector.extract_strided_slice %15 {offsets = [0, 0], sizes = [8, 64], strides = [1, 1]} : vector<8x256xf32> to vector<8x64xf32>
    %17 = arith.negf %16 : vector<8x64xf32>
    %18 = math.exp %17 : vector<8x64xf32>
    %cst_17 = arith.constant 1.000000e+00 : f32
    %19 = vector.broadcast %cst_17 : f32 to vector<8x64xf32>
    %20 = arith.addf %19, %18 : vector<8x64xf32>
    %21 = arith.divf %19, %20 : vector<8x64xf32>
    %22 = vector.extract_strided_slice %15 {offsets = [0, 64], sizes = [8, 64], strides = [1, 1]} : vector<8x256xf32> to vector<8x64xf32>
    %23 = arith.negf %22 : vector<8x64xf32>
    %24 = math.exp %23 : vector<8x64xf32>
    %cst_18 = arith.constant 1.000000e+00 : f32
    %25 = vector.broadcast %cst_18 : f32 to vector<8x64xf32>
    %26 = arith.addf %25, %24 : vector<8x64xf32>
    %27 = arith.divf %25, %26 : vector<8x64xf32>
    %28 = vector.extract_strided_slice %15 {offsets = [0, 128], sizes = [8, 64], strides = [1, 1]} : vector<8x256xf32> to vector<8x64xf32>
    %29 = math.tanh %28 : vector<8x64xf32>
    %30 = vector.extract_strided_slice %15 {offsets = [0, 192], sizes = [8, 64], strides = [1, 1]} : vector<8x256xf32> to vector<8x64xf32>
    %31 = arith.negf %30 : vector<8x64xf32>
    %32 = math.exp %31 : vector<8x64xf32>
    %cst_19 = arith.constant 1.000000e+00 : f32
    %33 = vector.broadcast %cst_19 : f32 to vector<8x64xf32>
    %34 = arith.addf %33, %32 : vector<8x64xf32>
    %35 = arith.divf %33, %34 : vector<8x64xf32>
    %36 = arith.mulf %27, %11 : vector<8x64xf32>
    %37 = arith.mulf %21, %29 : vector<8x64xf32>
    %38 = arith.addf %36, %37 : vector<8x64xf32>
    %39 = math.tanh %38 : vector<8x64xf32>
    %40 = arith.mulf %35, %39 : vector<8x64xf32>
    %c1 = arith.constant 1 : index
    %c0_20 = arith.constant 0 : index
    %c0_21 = arith.constant 0 : index
    %41 = vector.load %arg7[%c1, %c0_20, %c0_21] : memref<8x8x256xf32, #tpu.memory_space<vmem>>, vector<1x8x256xf32>
    %42 = vector.shape_cast %41 : vector<1x8x256xf32> to vector<8x256xf32>
    %cst_22 = arith.constant dense<0.000000e+00> : vector<8x256xf32>
    %43 = tpu.matmul %40, %9, %cst_22 {dimension_numbers = #tpu.dot_dimension_numbers<[1], [0], [0], [1], [0, 0, 1, 1], [], []>} : vector<8x64xf32>, vector<64x256xf32>, vector<8x256xf32> -> vector<8x256xf32>
    %44 = arith.addf %42, %43 : vector<8x256xf32>
    %45 = vector.extract_strided_slice %44 {offsets = [0, 0], sizes = [8, 64], strides = [1, 1]} : vector<8x256xf32> to vector<8x64xf32>
    %46 = arith.negf %45 : vector<8x64xf32>
    %47 = math.exp %46 : vector<8x64xf32>
    %cst_23 = arith.constant 1.000000e+00 : f32
    %48 = vector.broadcast %cst_23 : f32 to vector<8x64xf32>
    %49 = arith.addf %48, %47 : vector<8x64xf32>
    %50 = arith.divf %48, %49 : vector<8x64xf32>
    %51 = vector.extract_strided_slice %44 {offsets = [0, 64], sizes = [8, 64], strides = [1, 1]} : vector<8x256xf32> to vector<8x64xf32>
    %52 = arith.negf %51 : vector<8x64xf32>
    %53 = math.exp %52 : vector<8x64xf32>
    %cst_24 = arith.constant 1.000000e+00 : f32
    %54 = vector.broadcast %cst_24 : f32 to vector<8x64xf32>
    %55 = arith.addf %54, %53 : vector<8x64xf32>
    %56 = arith.divf %54, %55 : vector<8x64xf32>
    %57 = vector.extract_strided_slice %44 {offsets = [0, 128], sizes = [8, 64], strides = [1, 1]} : vector<8x256xf32> to vector<8x64xf32>
    %58 = math.tanh %57 : vector<8x64xf32>
    %59 = vector.extract_strided_slice %44 {offsets = [0, 192], sizes = [8, 64], strides = [1, 1]} : vector<8x256xf32> to vector<8x64xf32>
    %60 = arith.negf %59 : vector<8x64xf32>
    %61 = math.exp %60 : vector<8x64xf32>
    %cst_25 = arith.constant 1.000000e+00 : f32
    %62 = vector.broadcast %cst_25 : f32 to vector<8x64xf32>
    %63 = arith.addf %62, %61 : vector<8x64xf32>
    %64 = arith.divf %62, %63 : vector<8x64xf32>
    %65 = arith.mulf %56, %38 : vector<8x64xf32>
    %66 = arith.mulf %50, %58 : vector<8x64xf32>
    %67 = arith.addf %65, %66 : vector<8x64xf32>
    %68 = math.tanh %67 : vector<8x64xf32>
    %69 = arith.mulf %64, %68 : vector<8x64xf32>
    %c2 = arith.constant 2 : index
    %c0_26 = arith.constant 0 : index
    %c0_27 = arith.constant 0 : index
    %70 = vector.load %arg7[%c2, %c0_26, %c0_27] : memref<8x8x256xf32, #tpu.memory_space<vmem>>, vector<1x8x256xf32>
    %71 = vector.shape_cast %70 : vector<1x8x256xf32> to vector<8x256xf32>
    %cst_28 = arith.constant dense<0.000000e+00> : vector<8x256xf32>
    %72 = tpu.matmul %69, %9, %cst_28 {dimension_numbers = #tpu.dot_dimension_numbers<[1], [0], [0], [1], [0, 0, 1, 1], [], []>} : vector<8x64xf32>, vector<64x256xf32>, vector<8x256xf32> -> vector<8x256xf32>
    %73 = arith.addf %71, %72 : vector<8x256xf32>
    %74 = vector.extract_strided_slice %73 {offsets = [0, 0], sizes = [8, 64], strides = [1, 1]} : vector<8x256xf32> to vector<8x64xf32>
    %75 = arith.negf %74 : vector<8x64xf32>
    %76 = math.exp %75 : vector<8x64xf32>
    %cst_29 = arith.constant 1.000000e+00 : f32
    %77 = vector.broadcast %cst_29 : f32 to vector<8x64xf32>
    %78 = arith.addf %77, %76 : vector<8x64xf32>
    %79 = arith.divf %77, %78 : vector<8x64xf32>
    %80 = vector.extract_strided_slice %73 {offsets = [0, 64], sizes = [8, 64], strides = [1, 1]} : vector<8x256xf32> to vector<8x64xf32>
    %81 = arith.negf %80 : vector<8x64xf32>
    %82 = math.exp %81 : vector<8x64xf32>
    %cst_30 = arith.constant 1.000000e+00 : f32
    %83 = vector.broadcast %cst_30 : f32 to vector<8x64xf32>
    %84 = arith.addf %83, %82 : vector<8x64xf32>
    %85 = arith.divf %83, %84 : vector<8x64xf32>
    %86 = vector.extract_strided_slice %73 {offsets = [0, 128], sizes = [8, 64], strides = [1, 1]} : vector<8x256xf32> to vector<8x64xf32>
    %87 = math.tanh %86 : vector<8x64xf32>
    %88 = vector.extract_strided_slice %73 {offsets = [0, 192], sizes = [8, 64], strides = [1, 1]} : vector<8x256xf32> to vector<8x64xf32>
    %89 = arith.negf %88 : vector<8x64xf32>
    %90 = math.exp %89 : vector<8x64xf32>
    %cst_31 = arith.constant 1.000000e+00 : f32
    %91 = vector.broadcast %cst_31 : f32 to vector<8x64xf32>
    %92 = arith.addf %91, %90 : vector<8x64xf32>
    %93 = arith.divf %91, %92 : vector<8x64xf32>
    %94 = arith.mulf %85, %67 : vector<8x64xf32>
    %95 = arith.mulf %79, %87 : vector<8x64xf32>
    %96 = arith.addf %94, %95 : vector<8x64xf32>
    %97 = math.tanh %96 : vector<8x64xf32>
    %98 = arith.mulf %93, %97 : vector<8x64xf32>
    %c3 = arith.constant 3 : index
    %c0_32 = arith.constant 0 : index
    %c0_33 = arith.constant 0 : index
    %99 = vector.load %arg7[%c3, %c0_32, %c0_33] : memref<8x8x256xf32, #tpu.memory_space<vmem>>, vector<1x8x256xf32>
    %100 = vector.shape_cast %99 : vector<1x8x256xf32> to vector<8x256xf32>
    %cst_34 = arith.constant dense<0.000000e+00> : vector<8x256xf32>
    %101 = tpu.matmul %98, %9, %cst_34 {dimension_numbers = #tpu.dot_dimension_numbers<[1], [0], [0], [1], [0, 0, 1, 1], [], []>} : vector<8x64xf32>, vector<64x256xf32>, vector<8x256xf32> -> vector<8x256xf32>
    %102 = arith.addf %100, %101 : vector<8x256xf32>
    %103 = vector.extract_strided_slice %102 {offsets = [0, 0], sizes = [8, 64], strides = [1, 1]} : vector<8x256xf32> to vector<8x64xf32>
    %104 = arith.negf %103 : vector<8x64xf32>
    %105 = math.exp %104 : vector<8x64xf32>
    %cst_35 = arith.constant 1.000000e+00 : f32
    %106 = vector.broadcast %cst_35 : f32 to vector<8x64xf32>
    %107 = arith.addf %106, %105 : vector<8x64xf32>
    %108 = arith.divf %106, %107 : vector<8x64xf32>
    %109 = vector.extract_strided_slice %102 {offsets = [0, 64], sizes = [8, 64], strides = [1, 1]} : vector<8x256xf32> to vector<8x64xf32>
    %110 = arith.negf %109 : vector<8x64xf32>
    %111 = math.exp %110 : vector<8x64xf32>
    %cst_36 = arith.constant 1.000000e+00 : f32
    %112 = vector.broadcast %cst_36 : f32 to vector<8x64xf32>
    %113 = arith.addf %112, %111 : vector<8x64xf32>
    %114 = arith.divf %112, %113 : vector<8x64xf32>
    %115 = vector.extract_strided_slice %102 {offsets = [0, 128], sizes = [8, 64], strides = [1, 1]} : vector<8x256xf32> to vector<8x64xf32>
    %116 = math.tanh %115 : vector<8x64xf32>
    %117 = vector.extract_strided_slice %102 {offsets = [0, 192], sizes = [8, 64], strides = [1, 1]} : vector<8x256xf32> to vector<8x64xf32>
    %118 = arith.negf %117 : vector<8x64xf32>
    %119 = math.exp %118 : vector<8x64xf32>
    %cst_37 = arith.constant 1.000000e+00 : f32
    %120 = vector.broadcast %cst_37 : f32 to vector<8x64xf32>
    %121 = arith.addf %120, %119 : vector<8x64xf32>
    %122 = arith.divf %120, %121 : vector<8x64xf32>
    %123 = arith.mulf %114, %96 : vector<8x64xf32>
    %124 = arith.mulf %108, %116 : vector<8x64xf32>
    %125 = arith.addf %123, %124 : vector<8x64xf32>
    %126 = math.tanh %125 : vector<8x64xf32>
    %127 = arith.mulf %122, %126 : vector<8x64xf32>
    %c4 = arith.constant 4 : index
    %c0_38 = arith.constant 0 : index
    %c0_39 = arith.constant 0 : index
    %128 = vector.load %arg7[%c4, %c0_38, %c0_39] : memref<8x8x256xf32, #tpu.memory_space<vmem>>, vector<1x8x256xf32>
    %129 = vector.shape_cast %128 : vector<1x8x256xf32> to vector<8x256xf32>
    %cst_40 = arith.constant dense<0.000000e+00> : vector<8x256xf32>
    %130 = tpu.matmul %127, %9, %cst_40 {dimension_numbers = #tpu.dot_dimension_numbers<[1], [0], [0], [1], [0, 0, 1, 1], [], []>} : vector<8x64xf32>, vector<64x256xf32>, vector<8x256xf32> -> vector<8x256xf32>
    %131 = arith.addf %129, %130 : vector<8x256xf32>
    %132 = vector.extract_strided_slice %131 {offsets = [0, 0], sizes = [8, 64], strides = [1, 1]} : vector<8x256xf32> to vector<8x64xf32>
    %133 = arith.negf %132 : vector<8x64xf32>
    %134 = math.exp %133 : vector<8x64xf32>
    %cst_41 = arith.constant 1.000000e+00 : f32
    %135 = vector.broadcast %cst_41 : f32 to vector<8x64xf32>
    %136 = arith.addf %135, %134 : vector<8x64xf32>
    %137 = arith.divf %135, %136 : vector<8x64xf32>
    %138 = vector.extract_strided_slice %131 {offsets = [0, 64], sizes = [8, 64], strides = [1, 1]} : vector<8x256xf32> to vector<8x64xf32>
    %139 = arith.negf %138 : vector<8x64xf32>
    %140 = math.exp %139 : vector<8x64xf32>
    %cst_42 = arith.constant 1.000000e+00 : f32
    %141 = vector.broadcast %cst_42 : f32 to vector<8x64xf32>
    %142 = arith.addf %141, %140 : vector<8x64xf32>
    %143 = arith.divf %141, %142 : vector<8x64xf32>
    %144 = vector.extract_strided_slice %131 {offsets = [0, 128], sizes = [8, 64], strides = [1, 1]} : vector<8x256xf32> to vector<8x64xf32>
    %145 = math.tanh %144 : vector<8x64xf32>
    %146 = vector.extract_strided_slice %131 {offsets = [0, 192], sizes = [8, 64], strides = [1, 1]} : vector<8x256xf32> to vector<8x64xf32>
    %147 = arith.negf %146 : vector<8x64xf32>
    %148 = math.exp %147 : vector<8x64xf32>
    %cst_43 = arith.constant 1.000000e+00 : f32
    %149 = vector.broadcast %cst_43 : f32 to vector<8x64xf32>
    %150 = arith.addf %149, %148 : vector<8x64xf32>
    %151 = arith.divf %149, %150 : vector<8x64xf32>
    %152 = arith.mulf %143, %125 : vector<8x64xf32>
    %153 = arith.mulf %137, %145 : vector<8x64xf32>
    %154 = arith.addf %152, %153 : vector<8x64xf32>
    %155 = math.tanh %154 : vector<8x64xf32>
    %156 = arith.mulf %151, %155 : vector<8x64xf32>
    %c5 = arith.constant 5 : index
    %c0_44 = arith.constant 0 : index
    %c0_45 = arith.constant 0 : index
    %157 = vector.load %arg7[%c5, %c0_44, %c0_45] : memref<8x8x256xf32, #tpu.memory_space<vmem>>, vector<1x8x256xf32>
    %158 = vector.shape_cast %157 : vector<1x8x256xf32> to vector<8x256xf32>
    %cst_46 = arith.constant dense<0.000000e+00> : vector<8x256xf32>
    %159 = tpu.matmul %156, %9, %cst_46 {dimension_numbers = #tpu.dot_dimension_numbers<[1], [0], [0], [1], [0, 0, 1, 1], [], []>} : vector<8x64xf32>, vector<64x256xf32>, vector<8x256xf32> -> vector<8x256xf32>
    %160 = arith.addf %158, %159 : vector<8x256xf32>
    %161 = vector.extract_strided_slice %160 {offsets = [0, 0], sizes = [8, 64], strides = [1, 1]} : vector<8x256xf32> to vector<8x64xf32>
    %162 = arith.negf %161 : vector<8x64xf32>
    %163 = math.exp %162 : vector<8x64xf32>
    %cst_47 = arith.constant 1.000000e+00 : f32
    %164 = vector.broadcast %cst_47 : f32 to vector<8x64xf32>
    %165 = arith.addf %164, %163 : vector<8x64xf32>
    %166 = arith.divf %164, %165 : vector<8x64xf32>
    %167 = vector.extract_strided_slice %160 {offsets = [0, 64], sizes = [8, 64], strides = [1, 1]} : vector<8x256xf32> to vector<8x64xf32>
    %168 = arith.negf %167 : vector<8x64xf32>
    %169 = math.exp %168 : vector<8x64xf32>
    %cst_48 = arith.constant 1.000000e+00 : f32
    %170 = vector.broadcast %cst_48 : f32 to vector<8x64xf32>
    %171 = arith.addf %170, %169 : vector<8x64xf32>
    %172 = arith.divf %170, %171 : vector<8x64xf32>
    %173 = vector.extract_strided_slice %160 {offsets = [0, 128], sizes = [8, 64], strides = [1, 1]} : vector<8x256xf32> to vector<8x64xf32>
    %174 = math.tanh %173 : vector<8x64xf32>
    %175 = vector.extract_strided_slice %160 {offsets = [0, 192], sizes = [8, 64], strides = [1, 1]} : vector<8x256xf32> to vector<8x64xf32>
    %176 = arith.negf %175 : vector<8x64xf32>
    %177 = math.exp %176 : vector<8x64xf32>
    %cst_49 = arith.constant 1.000000e+00 : f32
    %178 = vector.broadcast %cst_49 : f32 to vector<8x64xf32>
    %179 = arith.addf %178, %177 : vector<8x64xf32>
    %180 = arith.divf %178, %179 : vector<8x64xf32>
    %181 = arith.mulf %172, %154 : vector<8x64xf32>
    %182 = arith.mulf %166, %174 : vector<8x64xf32>
    %183 = arith.addf %181, %182 : vector<8x64xf32>
    %184 = math.tanh %183 : vector<8x64xf32>
    %185 = arith.mulf %180, %184 : vector<8x64xf32>
    %c6 = arith.constant 6 : index
    %c0_50 = arith.constant 0 : index
    %c0_51 = arith.constant 0 : index
    %186 = vector.load %arg7[%c6, %c0_50, %c0_51] : memref<8x8x256xf32, #tpu.memory_space<vmem>>, vector<1x8x256xf32>
    %187 = vector.shape_cast %186 : vector<1x8x256xf32> to vector<8x256xf32>
    %cst_52 = arith.constant dense<0.000000e+00> : vector<8x256xf32>
    %188 = tpu.matmul %185, %9, %cst_52 {dimension_numbers = #tpu.dot_dimension_numbers<[1], [0], [0], [1], [0, 0, 1, 1], [], []>} : vector<8x64xf32>, vector<64x256xf32>, vector<8x256xf32> -> vector<8x256xf32>
    %189 = arith.addf %187, %188 : vector<8x256xf32>
    %190 = vector.extract_strided_slice %189 {offsets = [0, 0], sizes = [8, 64], strides = [1, 1]} : vector<8x256xf32> to vector<8x64xf32>
    %191 = arith.negf %190 : vector<8x64xf32>
    %192 = math.exp %191 : vector<8x64xf32>
    %cst_53 = arith.constant 1.000000e+00 : f32
    %193 = vector.broadcast %cst_53 : f32 to vector<8x64xf32>
    %194 = arith.addf %193, %192 : vector<8x64xf32>
    %195 = arith.divf %193, %194 : vector<8x64xf32>
    %196 = vector.extract_strided_slice %189 {offsets = [0, 64], sizes = [8, 64], strides = [1, 1]} : vector<8x256xf32> to vector<8x64xf32>
    %197 = arith.negf %196 : vector<8x64xf32>
    %198 = math.exp %197 : vector<8x64xf32>
    %cst_54 = arith.constant 1.000000e+00 : f32
    %199 = vector.broadcast %cst_54 : f32 to vector<8x64xf32>
    %200 = arith.addf %199, %198 : vector<8x64xf32>
    %201 = arith.divf %199, %200 : vector<8x64xf32>
    %202 = vector.extract_strided_slice %189 {offsets = [0, 128], sizes = [8, 64], strides = [1, 1]} : vector<8x256xf32> to vector<8x64xf32>
    %203 = math.tanh %202 : vector<8x64xf32>
    %204 = vector.extract_strided_slice %189 {offsets = [0, 192], sizes = [8, 64], strides = [1, 1]} : vector<8x256xf32> to vector<8x64xf32>
    %205 = arith.negf %204 : vector<8x64xf32>
    %206 = math.exp %205 : vector<8x64xf32>
    %cst_55 = arith.constant 1.000000e+00 : f32
    %207 = vector.broadcast %cst_55 : f32 to vector<8x64xf32>
    %208 = arith.addf %207, %206 : vector<8x64xf32>
    %209 = arith.divf %207, %208 : vector<8x64xf32>
    %210 = arith.mulf %201, %183 : vector<8x64xf32>
    %211 = arith.mulf %195, %203 : vector<8x64xf32>
    %212 = arith.addf %210, %211 : vector<8x64xf32>
    %213 = math.tanh %212 : vector<8x64xf32>
    %214 = arith.mulf %209, %213 : vector<8x64xf32>
    %c7 = arith.constant 7 : index
    %c0_56 = arith.constant 0 : index
    %c0_57 = arith.constant 0 : index
    %215 = vector.load %arg7[%c7, %c0_56, %c0_57] : memref<8x8x256xf32, #tpu.memory_space<vmem>>, vector<1x8x256xf32>
    %216 = vector.shape_cast %215 : vector<1x8x256xf32> to vector<8x256xf32>
    %cst_58 = arith.constant dense<0.000000e+00> : vector<8x256xf32>
    %217 = tpu.matmul %214, %9, %cst_58 {dimension_numbers = #tpu.dot_dimension_numbers<[1], [0], [0], [1], [0, 0, 1, 1], [], []>} : vector<8x64xf32>, vector<64x256xf32>, vector<8x256xf32> -> vector<8x256xf32>
    %218 = arith.addf %216, %217 : vector<8x256xf32>
    %219 = vector.extract_strided_slice %218 {offsets = [0, 0], sizes = [8, 64], strides = [1, 1]} : vector<8x256xf32> to vector<8x64xf32>
    %220 = arith.negf %219 : vector<8x64xf32>
    %221 = math.exp %220 : vector<8x64xf32>
    %cst_59 = arith.constant 1.000000e+00 : f32
    %222 = vector.broadcast %cst_59 : f32 to vector<8x64xf32>
    %223 = arith.addf %222, %221 : vector<8x64xf32>
    %224 = arith.divf %222, %223 : vector<8x64xf32>
    %225 = vector.extract_strided_slice %218 {offsets = [0, 64], sizes = [8, 64], strides = [1, 1]} : vector<8x256xf32> to vector<8x64xf32>
    %226 = arith.negf %225 : vector<8x64xf32>
    %227 = math.exp %226 : vector<8x64xf32>
    %cst_60 = arith.constant 1.000000e+00 : f32
    %228 = vector.broadcast %cst_60 : f32 to vector<8x64xf32>
    %229 = arith.addf %228, %227 : vector<8x64xf32>
    %230 = arith.divf %228, %229 : vector<8x64xf32>
    %231 = vector.extract_strided_slice %218 {offsets = [0, 128], sizes = [8, 64], strides = [1, 1]} : vector<8x256xf32> to vector<8x64xf32>
    %232 = math.tanh %231 : vector<8x64xf32>
    %233 = vector.extract_strided_slice %218 {offsets = [0, 192], sizes = [8, 64], strides = [1, 1]} : vector<8x256xf32> to vector<8x64xf32>
    %234 = arith.negf %233 : vector<8x64xf32>
    %235 = math.exp %234 : vector<8x64xf32>
    %cst_61 = arith.constant 1.000000e+00 : f32
    %236 = vector.broadcast %cst_61 : f32 to vector<8x64xf32>
    %237 = arith.addf %236, %235 : vector<8x64xf32>
    %238 = arith.divf %236, %237 : vector<8x64xf32>
    %239 = arith.mulf %230, %212 : vector<8x64xf32>
    %240 = arith.mulf %224, %232 : vector<8x64xf32>
    %241 = arith.addf %239, %240 : vector<8x64xf32>
    %242 = math.tanh %241 : vector<8x64xf32>
    %243 = arith.mulf %238, %242 : vector<8x64xf32>
    %c0_62 = arith.constant 0 : index
    %c0_63 = arith.constant 0 : index
    %244 = vector.load %arg4[%c0_62, %c0_63] : memref<64x128xf32, #tpu.memory_space<vmem>>, vector<64x128xf32>
    %cst_64 = arith.constant dense<0.000000e+00> : vector<8x128xf32>
    %245 = tpu.matmul %243, %244, %cst_64 {dimension_numbers = #tpu.dot_dimension_numbers<[1], [0], [0], [1], [0, 0, 1, 1], [], []>} : vector<8x64xf32>, vector<64x128xf32>, vector<8x128xf32> -> vector<8x128xf32>
    %c0_65 = arith.constant 0 : index
    %c0_66 = arith.constant 0 : index
    %246 = vector.load %arg5[%c0_65, %c0_66] : memref<1x128xf32, #tpu.memory_space<vmem>>, vector<1x128xf32>
    %247 = vector.broadcast %246 : vector<1x128xf32> to vector<8x128xf32>
    %248 = arith.addf %245, %247 : vector<8x128xf32>
    %c0_67 = arith.constant 0 : index
    %c0_68 = arith.constant 0 : index
    %249 = vector.load %arg6[%c0_67, %c0_68] : memref<8x128xf32, #tpu.memory_space<vmem>>, vector<8x128xf32>
    tpu.vector_store %arg6[%c0_67, %c0_68], %248 {strides = array<i32>} : memref<8x128xf32, #tpu.memory_space<vmem>>, vector<8x128xf32>,
    return
  }
}

</mosaic_0001>

<llo_original>
// kernel: tpu_custom_call.1
$region0: #{tpu_custom_call.1}
  #allocation0 [shape = 'u32[]', space=smem, size = 0x4, offset = 0x4, fixed_abs, tag = 'smem constant byte address 0x4 - core index']
  #allocation1 [shape = 'u32[144,128]{1,0:T(1,128)}', space=vmem, size = 0x12000, scoped, tag = 'internal scratch']
  #allocation2 [shape = 'f32[8,8,256]{2,1,0:T(8,128)}', space=vmem, size = 0x10000, scoped, tag = 'scratch operand']
  %s0 = inlined_call_operand.hbm [shape: f32[8,8,64], index: 0, kind: input, shape index: {}]
  %s1 = inlined_call_operand.hbm [shape: f32[64,256], index: 1, kind: input, shape index: {}]
  %s2 = inlined_call_operand.vmem [shape: f32[1,256], index: 2, kind: input, shape index: {}]
  %s3 = inlined_call_operand.hbm [shape: f32[64,256], index: 3, kind: input, shape index: {}]
  %s4 = inlined_call_operand.hbm [shape: f32[64,128], index: 4, kind: input, shape index: {}]
  %s5 = inlined_call_operand.vmem [shape: f32[1,128], index: 5, kind: input, shape index: {}]
  %s6 = inlined_call_operand.hbm [shape: f32[8,128], index: 6, kind: output, shape index: {}]
  %s7 = sld [smem:[#allocation0]]
  $region50: #{tpu_custom_call.1} parent=0
    _
  %s9 = ssub.s32 1, %s7
  %s10 = scalar_select 0, %s9, %s7
  $region1: #{tpu_custom_call.1} parent=0
    #allocation3 [shape = 'u8[32768]{0}', space=vmem, size = 0x8000, scoped, tag = 'input window, operand 0, single buffered']
    #allocation4 [shape = 's32[1]{0}', space=sflag, size = 0x4, scoped, tag = 'scoped memory for tpu_custom_call.1']
    #allocation5 [shape = 's32[1]{0}', space=sflag, size = 0x4, scoped, tag = 'scoped memory for tpu_custom_call.1']
    #allocation6 [shape = 'u8[65536]{0}', space=vmem, size = 0x10000, scoped, tag = 'input window, operand 1, single buffered']
    #allocation7 [shape = 's32[1]{0}', space=sflag, size = 0x4, scoped, tag = 'scoped memory for tpu_custom_call.1']
    #allocation8 [shape = 'u8[65536]{0}', space=vmem, size = 0x10000, scoped, tag = 'input window, operand 3, single buffered']
    #allocation9 [shape = 'u8[32768]{0}', space=vmem, size = 0x8000, scoped, tag = 'input window, operand 4, single buffered']
    #allocation10 [shape = 's32[1]{0}', space=sflag, size = 0x4, scoped, tag = 'scoped memory for tpu_custom_call.1']
    #allocation11 [shape = 'u8[4096]{0}', space=vmem, size = 0x1000, scoped, tag = 'output window, operand 0, single buffered']
    %11 = vsyncpa [#allocation4], 0
    %12 = vsyncpa [#allocation7], 0
    %13 = vsyncpa [#allocation10], 0
    %14 = vsyncpa [#allocation5], 0
    // Predicated region
    $region2: #{tpu_custom_call.1} parent=1 // pred_check
      _
    $region3: #{tpu_custom_call.1} parent=1 // pred_check_branch
      %16 = sbr.rel (0) target = $region5
    $region4: #{tpu_custom_call.1} parent=1 // pred_region
      %s18 = ssub.s32 1024, 1024
      %19 = vsyncadd [#allocation4], %s18
      %s20 = sshll.u32 [#allocation3], 4
      %s21 = int_to_ptr.vmem [resolvable:$true] %s20
      %26 = dma.hbm_to_vmem [thread:$0]  %s0, 1024, %s21, [#allocation4], 128, 128, 8
    $region5: #{tpu_custom_call.1} parent=1 // pred_fallthru
      _
    // Predicated region
    $region6: #{tpu_custom_call.1} parent=1 // pred_check
      _
    $region7: #{tpu_custom_call.1} parent=1 // pred_check_branch
      %28 = sbr.rel (0) target = $region9
    $region8: #{tpu_custom_call.1} parent=1 // pred_region
      %s30 = ssub.s32 2048, 2048
      %31 = vsyncadd [#allocation7], %s30
      %s32 = sshll.u32 [#allocation6], 4
      %s33 = int_to_ptr.vmem [resolvable:$true] %s32
      %38 = dma.hbm_to_vmem [thread:$0]  %s1, 2048, %s33, [#allocation7], 256, 256, 16
    $region9: #{tpu_custom_call.1} parent=1 // pred_fallthru
      _
    // Predicated region
    $region10: #{tpu_custom_call.1} parent=1 // pred_check
      _
    $region11: #{tpu_custom_call.1} parent=1 // pred_check_branch
      %40 = sbr.rel (0) target = $region13
    $region12: #{tpu_custom_call.1} parent=1 // pred_region
      _
    $region13: #{tpu_custom_call.1} parent=1 // pred_fallthru
      _
    // Predicated region
    $region14: #{tpu_custom_call.1} parent=1 // pred_check
      _
    $region15: #{tpu_custom_call.1} parent=1 // pred_check_branch
      %42 = sbr.rel (0) target = $region17
    $region16: #{tpu_custom_call.1} parent=1 // pred_region
      %s44 = ssub.s32 2048, 2048
      %45 = vsyncadd [#allocation7], %s44
      %s46 = sshll.u32 [#allocation8], 4
      %s47 = int_to_ptr.vmem [resolvable:$true] %s46
      %52 = dma.hbm_to_vmem [thread:$0]  %s3, 2048, %s47, [#allocation7], 256, 256, 16
    $region17: #{tpu_custom_call.1} parent=1 // pred_fallthru
      _
    // Predicated region
    $region18: #{tpu_custom_call.1} parent=1 // pred_check
      _
    $region19: #{tpu_custom_call.1} parent=1 // pred_check_branch
      %54 = sbr.rel (0) target = $region21
    $region20: #{tpu_custom_call.1} parent=1 // pred_region
      %s56 = ssub.s32 1024, 1024
      %57 = vsyncadd [#allocation10], %s56
      %s58 = sshll.u32 [#allocation9], 4
      %s59 = int_to_ptr.vmem [resolvable:$true] %s58
      %64 = dma.hbm_to_vmem [thread:$0]  %s4, 1024, %s59, [#allocation10], 128, 128, 8
    $region21: #{tpu_custom_call.1} parent=1 // pred_fallthru
      _
    // Predicated region
    $region22: #{tpu_custom_call.1} parent=1 // pred_check
      _
    $region23: #{tpu_custom_call.1} parent=1 // pred_check_branch
      %66 = sbr.rel (0) target = $region25
    $region24: #{tpu_custom_call.1} parent=1 // pred_region
      _
    $region25: #{tpu_custom_call.1} parent=1 // pred_fallthru
      _
    // Predicated region
    $region26: #{tpu_custom_call.1} parent=1 // pred_check
      _
    $region27: #{tpu_custom_call.1} parent=1 // pred_check_branch
      %68 = sbr.rel (0) target = $region29
    $region28: #{tpu_custom_call.1} parent=1 // pred_region
      %69 = dma.done [#allocation4], 1024
    $region29: #{tpu_custom_call.1} parent=1 // pred_fallthru
      _
    // Predicated region
    $region30: #{tpu_custom_call.1} parent=1 // pred_check
      _
    $region31: #{tpu_custom_call.1} parent=1 // pred_check_branch
      %71 = sbr.rel (0) target = $region33
    $region32: #{tpu_custom_call.1} parent=1 // pred_region
      %72 = dma.done [#allocation7], 2048
    $region33: #{tpu_custom_call.1} parent=1 // pred_fallthru
      _
    // Predicated region
    $region34: #{tpu_custom_call.1} parent=1 // pred_check
      _
    $region35: #{tpu_custom_call.1} parent=1 // pred_check_branch
      %74 = sbr.rel (0) target = $region37
    $region36: #{tpu_custom_call.1} parent=1 // pred_region
      %75 = dma.done [#allocation7], 2048
    $region37: #{tpu_custom_call.1} parent=1 // pred_fallthru
      _
    // Predicated region
    $region38: #{tpu_custom_call.1} parent=1 // pred_check
      _
    $region39: #{tpu_custom_call.1} parent=1 // pred_check_branch
      %77 = sbr.rel (0) target = $region41
    $region40: #{tpu_custom_call.1} parent=1 // pred_region
      %78 = dma.done [#allocation10], 1024
    $region41: #{tpu_custom_call.1} parent=1 // pred_fallthru
      _
    %v79 = vld [vmem:[#allocation3] sm:$0xff]
    %v80 = vld [vmem:[#allocation3 + $0x8] sm:$0xff]
    %v81 = vld [vmem:[#allocation3 + $0x10] sm:$0xff]
    %v82 = vld [vmem:[#allocation3 + $0x18] sm:$0xff]
    %v83 = vld [vmem:[#allocation3 + $0x20] sm:$0xff]
    %v84 = vld [vmem:[#allocation3 + $0x28] sm:$0xff]
    %v85 = vld [vmem:[#allocation3 + $0x30] sm:$0xff]
    %v86 = vld [vmem:[#allocation3 + $0x38] sm:$0xff]
    %v87 = vld [vmem:[#allocation6] sm:$0xff]
    %v88 = vld [vmem:[#allocation6 + $0x8] sm:$0xff]
    %v89 = vld [vmem:[#allocation6 + $0x10] sm:$0xff]
    %v90 = vld [vmem:[#allocation6 + $0x18] sm:$0xff]
    %v91 = vld [vmem:[#allocation6 + $0x20] sm:$0xff]
    %v92 = vld [vmem:[#allocation6 + $0x28] sm:$0xff]
    %v93 = vld [vmem:[#allocation6 + $0x30] sm:$0xff]
    %v94 = vld [vmem:[#allocation6 + $0x38] sm:$0xff]
    %v95 = vld [vmem:[#allocation6 + $0x40] sm:$0xff]
    %v96 = vld [vmem:[#allocation6 + $0x48] sm:$0xff]
    %v97 = vld [vmem:[#allocation6 + $0x50] sm:$0xff]
    %v98 = vld [vmem:[#allocation6 + $0x58] sm:$0xff]
    %v99 = vld [vmem:[#allocation6 + $0x60] sm:$0xff]
    %v100 = vld [vmem:[#allocation6 + $0x68] sm:$0xff]
    %v101 = vld [vmem:[#allocation6 + $0x70] sm:$0xff]
    %v102 = vld [vmem:[#allocation6 + $0x78] sm:$0xff]
    %v103 = vld [vmem:[%s2] sm:$0x3]
    %v105 = vlaneseq
    %v106 = vshrl.u32 %v105, 7
    %v107 = vsub.s32 0, %v106
    %v108 = vrot.slane %v103, %v107
    %v109 = vlaneseq
    %v110 = vshrl.u32 %v109, 7
    %v111 = vsub.s32 1, %v110
    %v112 = vrot.slane %v103, %v111
    %vm115 = vcmask 523264
    %v117 = vsel %vm115, %v79, 0
    %v120 = vsel %vm115, %v80, 0
    %v123 = vsel %vm115, %v81, 0
    %v126 = vsel %vm115, %v82, 0
    %v129 = vsel %vm115, %v83, 0
    %v132 = vsel %vm115, %v84, 0
    %v135 = vsel %vm115, %v85, 0
    %v138 = vsel %vm115, %v86, 0
    %140 = vmatprep.subr.mxu0 %v88
    %141 = vmatpush1.msra.mxu0 %v87
    %142 = vmatprep.subr.mxu0 %v90
    %143 = vmatpush1.msra.mxu0 %v89
    %144 = vmatprep.subr.mxu0 %v92
    %145 = vmatpush1.msra.mxu0 %v91
    %146 = vmatprep.subr.mxu0 %v94
    %147 = vmatpush1.msra.mxu0 %v93
    %148 = vmatprep.subr.mxu0 %v96
    %149 = vmatpush1.msra.mxu0 %v95
    %150 = vmatprep.subr.mxu0 %v98
    %151 = vmatpush1.msra.mxu0 %v97
    %152 = vmatprep.subr.mxu0 %v100
    %153 = vmatpush1.msra.mxu0 %v99
    %154 = vmatprep.subr.mxu0 %v102
    %155 = vmatpush1.msra.mxu0 %v101
    %156 = vmatprep.subr.mxu0 0.0
    %157 = vmatpush1.msra.mxu0 0.0
    %158 = vmatprep.subr.mxu0 0.0
    %159 = vmatpush1.msra.mxu0 0.0
    %160 = vmatprep.subr.mxu0 0.0
    %161 = vmatpush1.msra.mxu0 0.0
    %162 = vmatprep.subr.mxu0 0.0
    %163 = vmatpush1.msra.mxu0 0.0
    %164 = vmatprep.subr.mxu0 0.0
    %165 = vmatpush1.msra.mxu0 0.0
    %166 = vmatprep.subr.mxu0 0.0
    %167 = vmatpush1.msra.mxu0 0.0
    %168 = vmatprep.subr.mxu0 0.0
    %169 = vmatpush1.msra.mxu0 0.0
    %170 = vmatprep.subr.mxu0 0.0
    %171 = vmatpush1.msra.mxu0 0.0
    %172 = vmatprep.subr.mxu0 0.0
    %173 = vmatpush1.msra.mxu0 0.0
    %174 = vmatprep.subr.mxu0 0.0
    %175 = vmatpush1.msra.mxu0 0.0
    %176 = vmatprep.subr.mxu0 0.0
    %177 = vmatpush1.msra.mxu0 0.0
    %178 = vmatprep.subr.mxu0 0.0
    %179 = vmatpush1.msra.mxu0 0.0
    %180 = vmatprep.subr.mxu0 0.0
    %181 = vmatpush1.msra.mxu0 0.0
    %182 = vmatprep.subr.mxu0 0.0
    %183 = vmatpush1.msra.mxu0 0.0
    %184 = vmatprep.subr.mxu0 0.0
    %185 = vmatpush1.msra.mxu0 0.0
    %186 = vmatprep.subr.mxu0 0.0
    %187 = vmatpush1.msra.mxu0 0.0
    %188 = vmatprep.subr.mxu0 0.0
    %189 = vmatpush1.msra.mxu0 0.0
    %190 = vmatprep.subr.mxu0 0.0
    %191 = vmatpush1.msra.mxu0 0.0
    %192 = vmatprep.subr.mxu0 0.0
    %193 = vmatpush1.msra.mxu0 0.0
    %194 = vmatprep.subr.mxu0 0.0
    %195 = vmatpush1.msra.mxu0 0.0
    %196 = vmatprep.subr.mxu0 0.0
    %197 = vmatpush1.msra.mxu0 0.0
    %198 = vmatprep.subr.mxu0 0.0
    %199 = vmatpush1.msra.mxu0 0.0
    %200 = vmatprep.subr.mxu0 0.0
    %201 = vmatpush1.msra.mxu0 0.0
    %202 = vmatprep.subr.mxu0 0.0
    %203 = vmatpush1.msra.mxu0 0.0
    %204 = vmatprep.mubr.f32.mxu0 0.0
    %205 = vmatmul.mubr.f32.gmra.mrb[0].mxu0 %v117
    %v206 = vpop.f32.mrb[0].mxu0
    %v207 = vadd.f32 %v108, %v206
    %v208 = vpop.f32.mrb[0].mxu0
    %v209 = vadd.f32 %v112, %v208
    %210 = vmatprep.mubr.f32.mxu0 0.0
    %211 = vmatmul.mubr.f32.gmra.mrb[0].mxu0 %v120
    %v212 = vpop.f32.mrb[0].mxu0
    %v213 = vadd.f32 %v108, %v212
    %v214 = vpop.f32.mrb[0].mxu0
    %v215 = vadd.f32 %v112, %v214
    %216 = vmatprep.mubr.f32.mxu0 0.0
    %217 = vmatmul.mubr.f32.gmra.mrb[0].mxu0 %v123
    %v218 = vpop.f32.mrb[0].mxu0
    %v219 = vadd.f32 %v108, %v218
    %v220 = vpop.f32.mrb[0].mxu0
    %v221 = vadd.f32 %v112, %v220
    %222 = vmatprep.mubr.f32.mxu0 0.0
    %223 = vmatmul.mubr.f32.gmra.mrb[0].mxu0 %v126
    %v224 = vpop.f32.mrb[0].mxu0
    %v225 = vadd.f32 %v108, %v224
    %v226 = vpop.f32.mrb[0].mxu0
    %v227 = vadd.f32 %v112, %v226
    %228 = vmatprep.mubr.f32.mxu0 0.0
    %229 = vmatmul.mubr.f32.gmra.mrb[0].mxu0 %v129
    %v230 = vpop.f32.mrb[0].mxu0
    %v231 = vadd.f32 %v108, %v230
    %v232 = vpop.f32.mrb[0].mxu0
    %v233 = vadd.f32 %v112, %v232
    %234 = vmatprep.mubr.f32.mxu0 0.0
    %235 = vmatmul.mubr.f32.gmra.mrb[0].mxu0 %v132
    %v236 = vpop.f32.mrb[0].mxu0
    %v237 = vadd.f32 %v108, %v236
    %v238 = vpop.f32.mrb[0].mxu0
    %v239 = vadd.f32 %v112, %v238
    %240 = vmatprep.mubr.f32.mxu0 0.0
    %241 = vmatmul.mubr.f32.gmra.mrb[0].mxu0 %v135
    %v242 = vpop.f32.mrb[0].mxu0
    %v243 = vadd.f32 %v108, %v242
    %v244 = vpop.f32.mrb[0].mxu0
    %v245 = vadd.f32 %v112, %v244
    %246 = vmatprep.mubr.f32.mxu0 0.0
    %247 = vmatmul.mubr.f32.gmra.mrb[0].mxu0 %v138
    %v248 = vpop.f32.mrb[0].mxu0
    %v249 = vadd.f32 %v108, %v248
    %v250 = vpop.f32.mrb[0].mxu0
    %v251 = vadd.f32 %v112, %v250
    %252 = vdwg.mxu0
    %253 = vst [vmem:[#allocation2] sm:$0xff] %v207
    %254 = vst [vmem:[#allocation2 + $0x8] sm:$0xff] %v209
    %255 = vst [vmem:[#allocation2 + $0x10] sm:$0xff] %v213
    %256 = vst [vmem:[#allocation2 + $0x18] sm:$0xff] %v215
    %257 = vst [vmem:[#allocation2 + $0x20] sm:$0xff] %v219
    %258 = vst [vmem:[#allocation2 + $0x28] sm:$0xff] %v221
    %259 = vst [vmem:[#allocation2 + $0x30] sm:$0xff] %v225
    %260 = vst [vmem:[#allocation2 + $0x38] sm:$0xff] %v227
    %261 = vst [vmem:[#allocation2 + $0x40] sm:$0xff] %v231
    %262 = vst [vmem:[#allocation2 + $0x48] sm:$0xff] %v233
    %263 = vst [vmem:[#allocation2 + $0x50] sm:$0xff] %v237
    %264 = vst [vmem:[#allocation2 + $0x58] sm:$0xff] %v239
    %265 = vst [vmem:[#allocation2 + $0x60] sm:$0xff] %v243
    %266 = vst [vmem:[#allocation2 + $0x68] sm:$0xff] %v245
    %267 = vst [vmem:[#allocation2 + $0x70] sm:$0xff] %v249
    %268 = vst [vmem:[#allocation2 + $0x78] sm:$0xff] %v251
    %v269 = vld [vmem:[#allocation8] sm:$0xff]
    %v270 = vld [vmem:[#allocation8 + $0x8] sm:$0xff]
    %v271 = vld [vmem:[#allocation8 + $0x10] sm:$0xff]
    %v272 = vld [vmem:[#allocation8 + $0x18] sm:$0xff]
    %v273 = vld [vmem:[#allocation8 + $0x20] sm:$0xff]
    %v274 = vld [vmem:[#allocation8 + $0x28] sm:$0xff]
    %v275 = vld [vmem:[#allocation8 + $0x30] sm:$0xff]
    %v276 = vld [vmem:[#allocation8 + $0x38] sm:$0xff]
    %v277 = vld [vmem:[#allocation8 + $0x40] sm:$0xff]
    %v278 = vld [vmem:[#allocation8 + $0x48] sm:$0xff]
    %v279 = vld [vmem:[#allocation8 + $0x50] sm:$0xff]
    %v280 = vld [vmem:[#allocation8 + $0x58] sm:$0xff]
    %v281 = vld [vmem:[#allocation8 + $0x60] sm:$0xff]
    %v282 = vld [vmem:[#allocation8 + $0x68] sm:$0xff]
    %v283 = vld [vmem:[#allocation8 + $0x70] sm:$0xff]
    %v284 = vld [vmem:[#allocation8 + $0x78] sm:$0xff]
    %v285 = vld [vmem:[#allocation2] sm:$0xff]
    %v286 = vld [vmem:[#allocation2 + $0x8] sm:$0xff]
    %v288 = vsel %vm115, 0.0, 0
    %290 = vmatprep.subr.mxu0 %v270
    %291 = vmatpush1.msra.mxu0 %v269
    %292 = vmatprep.subr.mxu0 %v272
    %293 = vmatpush1.msra.mxu0 %v271
    %294 = vmatprep.subr.mxu0 %v274
    %295 = vmatpush1.msra.mxu0 %v273
    %296 = vmatprep.subr.mxu0 %v276
    %297 = vmatpush1.msra.mxu0 %v275
    %298 = vmatprep.subr.mxu0 %v278
    %299 = vmatpush1.msra.mxu0 %v277
    %300 = vmatprep.subr.mxu0 %v280
    %301 = vmatpush1.msra.mxu0 %v279
    %302 = vmatprep.subr.mxu0 %v282
    %303 = vmatpush1.msra.mxu0 %v281
    %304 = vmatprep.subr.mxu0 %v284
    %305 = vmatpush1.msra.mxu0 %v283
    %306 = vmatprep.subr.mxu0 0.0
    %307 = vmatpush1.msra.mxu0 0.0
    %308 = vmatprep.subr.mxu0 0.0
    %309 = vmatpush1.msra.mxu0 0.0
    %310 = vmatprep.subr.mxu0 0.0
    %311 = vmatpush1.msra.mxu0 0.0
    %312 = vmatprep.subr.mxu0 0.0
    %313 = vmatpush1.msra.mxu0 0.0
    %314 = vmatprep.subr.mxu0 0.0
    %315 = vmatpush1.msra.mxu0 0.0
    %316 = vmatprep.subr.mxu0 0.0
    %317 = vmatpush1.msra.mxu0 0.0
    %318 = vmatprep.subr.mxu0 0.0
    %319 = vmatpush1.msra.mxu0 0.0
    %320 = vmatprep.subr.mxu0 0.0
    %321 = vmatpush1.msra.mxu0 0.0
    %322 = vmatprep.subr.mxu0 0.0
    %323 = vmatpush1.msra.mxu0 0.0
    %324 = vmatprep.subr.mxu0 0.0
    %325 = vmatpush1.msra.mxu0 0.0
    %326 = vmatprep.subr.mxu0 0.0
    %327 = vmatpush1.msra.mxu0 0.0
    %328 = vmatprep.subr.mxu0 0.0
    %329 = vmatpush1.msra.mxu0 0.0
    %330 = vmatprep.subr.mxu0 0.0
    %331 = vmatpush1.msra.mxu0 0.0
    %332 = vmatprep.subr.mxu0 0.0
    %333 = vmatpush1.msra.mxu0 0.0
    %334 = vmatprep.subr.mxu0 0.0
    %335 = vmatpush1.msra.mxu0 0.0
    %336 = vmatprep.subr.mxu0 0.0
    %337 = vmatpush1.msra.mxu0 0.0
    %338 = vmatprep.subr.mxu0 0.0
    %339 = vmatpush1.msra.mxu0 0.0
    %340 = vmatprep.subr.mxu0 0.0
    %341 = vmatpush1.msra.mxu0 0.0
    %342 = vmatprep.subr.mxu0 0.0
    %343 = vmatpush1.msra.mxu0 0.0
    %344 = vmatprep.subr.mxu0 0.0
    %345 = vmatpush1.msra.mxu0 0.0
    %346 = vmatprep.subr.mxu0 0.0
    %347 = vmatpush1.msra.mxu0 0.0
    %348 = vmatprep.subr.mxu0 0.0
    %349 = vmatpush1.msra.mxu0 0.0
    %350 = vmatprep.subr.mxu0 0.0
    %351 = vmatpush1.msra.mxu0 0.0
    %352 = vmatprep.subr.mxu0 0.0
    %353 = vmatpush1.msra.mxu0 0.0
    %354 = vmatprep.mubr.f32.mxu0 0.0
    %355 = vmatmul.mubr.f32.gmra.mrb[0].mxu0 %v288
    %v356 = vpop.f32.mrb[0].mxu0
    %v357 = vadd.f32 0.0, %v356
    %v358 = vpop.f32.mrb[0].mxu0
    %v359 = vadd.f32 0.0, %v358
    %360 = vdwg.mxu0
    %v361 = vadd.f32 %v285, %v357
    %v362 = vadd.f32 %v286, %v359
    %v363 = vxor.u32 %v361, 2147483648
    %v364 = vmul.f32 %v363, 1.442695
    %v365 = vpow.pop %v364
    %v366 = vadd.f32 %v365, 1.0
    %v367 = vrcp.pop %v366
    %v368 = vmul.f32 1.0, %v367
    %v369 = vtanh.pop %v362
    %v370 = vxor.u32 %v362, 2147483648
    %v371 = vmul.f32 %v370, 1.442695
    %v372 = vpow.pop %v371
    %v373 = vadd.f32 %v372, 1.0
    %v374 = vrcp.pop %v373
    %v375 = vmul.f32 1.0, %v374
    %v376 = vmul.f32 %v368, 0.0
    %v377 = vmul.f32 %v368, %v369
    %379 = vrot.lane.b32.xlu0 %v377, 64
    %v380 = vpop.permute.xlu0 %379
    %v382 = vadd.f32 %v376, %v380
    %v383 = vtanh.pop %v382
    %v384 = vmul.f32 %v375, %v383
    %s385 = scalar_lea.vmem [#allocation2], 16
    %v386 = vld [vmem:[%s385] sm:$0xff]
    %v387 = vld [vmem:[%s385 + $0x8] sm:$0xff]
    %389 = vrot.lane.b32.xlu0 %v384, 64
    %v390 = vpop.permute.xlu0 %389
    %v391 = vsel %vm115, %v390, 0
    %393 = vmatprep.subr.mxu0 %v270
    %394 = vmatpush1.msra.mxu0 %v269
    %395 = vmatprep.subr.mxu0 %v272
    %396 = vmatpush1.msra.mxu0 %v271
    %397 = vmatprep.subr.mxu0 %v274
    %398 = vmatpush1.msra.mxu0 %v273
    %399 = vmatprep.subr.mxu0 %v276
    %400 = vmatpush1.msra.mxu0 %v275
    %401 = vmatprep.subr.mxu0 %v278
    %402 = vmatpush1.msra.mxu0 %v277
    %403 = vmatprep.subr.mxu0 %v280
    %404 = vmatpush1.msra.mxu0 %v279
    %405 = vmatprep.subr.mxu0 %v282
    %406 = vmatpush1.msra.mxu0 %v281
    %407 = vmatprep.subr.mxu0 %v284
    %408 = vmatpush1.msra.mxu0 %v283
    %409 = vmatprep.subr.mxu0 0.0
    %410 = vmatpush1.msra.mxu0 0.0
    %411 = vmatprep.subr.mxu0 0.0
    %412 = vmatpush1.msra.mxu0 0.0
    %413 = vmatprep.subr.mxu0 0.0
    %414 = vmatpush1.msra.mxu0 0.0
    %415 = vmatprep.subr.mxu0 0.0
    %416 = vmatpush1.msra.mxu0 0.0
    %417 = vmatprep.subr.mxu0 0.0
    %418 = vmatpush1.msra.mxu0 0.0
    %419 = vmatprep.subr.mxu0 0.0
    %420 = vmatpush1.msra.mxu0 0.0
    %421 = vmatprep.subr.mxu0 0.0
    %422 = vmatpush1.msra.mxu0 0.0
    %423 = vmatprep.subr.mxu0 0.0
    %424 = vmatpush1.msra.mxu0 0.0
    %425 = vmatprep.subr.mxu0 0.0
    %426 = vmatpush1.msra.mxu0 0.0
    %427 = vmatprep.subr.mxu0 0.0
    %428 = vmatpush1.msra.mxu0 0.0
    %429 = vmatprep.subr.mxu0 0.0
    %430 = vmatpush1.msra.mxu0 0.0
    %431 = vmatprep.subr.mxu0 0.0
    %432 = vmatpush1.msra.mxu0 0.0
    %433 = vmatprep.subr.mxu0 0.0
    %434 = vmatpush1.msra.mxu0 0.0
    %435 = vmatprep.subr.mxu0 0.0
    %436 = vmatpush1.msra.mxu0 0.0
    %437 = vmatprep.subr.mxu0 0.0
    %438 = vmatpush1.msra.mxu0 0.0
    %439 = vmatprep.subr.mxu0 0.0
    %440 = vmatpush1.msra.mxu0 0.0
    %441 = vmatprep.subr.mxu0 0.0
    %442 = vmatpush1.msra.mxu0 0.0
    %443 = vmatprep.subr.mxu0 0.0
    %444 = vmatpush1.msra.mxu0 0.0
    %445 = vmatprep.subr.mxu0 0.0
    %446 = vmatpush1.msra.mxu0 0.0
    %447 = vmatprep.subr.mxu0 0.0
    %448 = vmatpush1.msra.mxu0 0.0
    %449 = vmatprep.subr.mxu0 0.0
    %450 = vmatpush1.msra.mxu0 0.0
    %451 = vmatprep.subr.mxu0 0.0
    %452 = vmatpush1.msra.mxu0 0.0
    %453 = vmatprep.subr.mxu0 0.0
    %454 = vmatpush1.msra.mxu0 0.0
    %455 = vmatprep.subr.mxu0 0.0
    %456 = vmatpush1.msra.mxu0 0.0
    %457 = vmatprep.mubr.f32.mxu0 0.0
    %458 = vmatmul.mubr.f32.gmra.mrb[0].mxu0 %v391
    %v459 = vpop.f32.mrb[0].mxu0
    %v460 = vadd.f32 0.0, %v459
    %v461 = vpop.f32.mrb[0].mxu0
    %v462 = vadd.f32 0.0, %v461
    %463 = vdwg.mxu0
    %v464 = vadd.f32 %v386, %v460
    %v465 = vadd.f32 %v387, %v462
    %v466 = vxor.u32 %v464, 2147483648
    %v467 = vmul.f32 %v466, 1.442695
    %v468 = vpow.pop %v467
    %v469 = vadd.f32 %v468, 1.0
    %v470 = vrcp.pop %v469
    %v471 = vmul.f32 1.0, %v470
    %v472 = vtanh.pop %v465
    %v473 = vxor.u32 %v465, 2147483648
    %v474 = vmul.f32 %v473, 1.442695
    %v475 = vpow.pop %v474
    %v476 = vadd.f32 %v475, 1.0
    %v477 = vrcp.pop %v476
    %v478 = vmul.f32 1.0, %v477
    %v479 = vmul.f32 %v471, %v382
    %v480 = vmul.f32 %v471, %v472
    %482 = vrot.lane.b32.xlu0 %v480, 64
    %v483 = vpop.permute.xlu0 %482
    %v485 = vadd.f32 %v479, %v483
    %v486 = vtanh.pop %v485
    %v487 = vmul.f32 %v478, %v486
    %s488 = scalar_lea.vmem [#allocation2], 32
    %v489 = vld [vmem:[%s488] sm:$0xff]
    %v490 = vld [vmem:[%s488 + $0x8] sm:$0xff]
    %492 = vrot.lane.b32.xlu0 %v487, 64
    %v493 = vpop.permute.xlu0 %492
    %v494 = vsel %vm115, %v493, 0
    %496 = vmatprep.subr.mxu0 %v270
    %497 = vmatpush1.msra.mxu0 %v269
    %498 = vmatprep.subr.mxu0 %v272
    %499 = vmatpush1.msra.mxu0 %v271
    %500 = vmatprep.subr.mxu0 %v274
    %501 = vmatpush1.msra.mxu0 %v273
    %502 = vmatprep.subr.mxu0 %v276
    %503 = vmatpush1.msra.mxu0 %v275
    %504 = vmatprep.subr.mxu0 %v278
    %505 = vmatpush1.msra.mxu0 %v277
    %506 = vmatprep.subr.mxu0 %v280
    %507 = vmatpush1.msra.mxu0 %v279
    %508 = vmatprep.subr.mxu0 %v282
    %509 = vmatpush1.msra.mxu0 %v281
    %510 = vmatprep.subr.mxu0 %v284
    %511 = vmatpush1.msra.mxu0 %v283
    %512 = vmatprep.subr.mxu0 0.0
    %513 = vmatpush1.msra.mxu0 0.0
    %514 = vmatprep.subr.mxu0 0.0
    %515 = vmatpush1.msra.mxu0 0.0
    %516 = vmatprep.subr.mxu0 0.0
    %517 = vmatpush1.msra.mxu0 0.0
    %518 = vmatprep.subr.mxu0 0.0
    %519 = vmatpush1.msra.mxu0 0.0
    %520 = vmatprep.subr.mxu0 0.0
    %521 = vmatpush1.msra.mxu0 0.0
    %522 = vmatprep.subr.mxu0 0.0
    %523 = vmatpush1.msra.mxu0 0.0
    %524 = vmatprep.subr.mxu0 0.0
    %525 = vmatpush1.msra.mxu0 0.0
    %526 = vmatprep.subr.mxu0 0.0
    %527 = vmatpush1.msra.mxu0 0.0
    %528 = vmatprep.subr.mxu0 0.0
    %529 = vmatpush1.msra.mxu0 0.0
    %530 = vmatprep.subr.mxu0 0.0
    %531 = vmatpush1.msra.mxu0 0.0
    %532 = vmatprep.subr.mxu0 0.0
    %533 = vmatpush1.msra.mxu0 0.0
    %534 = vmatprep.subr.mxu0 0.0
    %535 = vmatpush1.msra.mxu0 0.0
    %536 = vmatprep.subr.mxu0 0.0
    %537 = vmatpush1.msra.mxu0 0.0
    %538 = vmatprep.subr.mxu0 0.0
    %539 = vmatpush1.msra.mxu0 0.0
    %540 = vmatprep.subr.mxu0 0.0
    %541 = vmatpush1.msra.mxu0 0.0
    %542 = vmatprep.subr.mxu0 0.0
    %543 = vmatpush1.msra.mxu0 0.0
    %544 = vmatprep.subr.mxu0 0.0
    %545 = vmatpush1.msra.mxu0 0.0
    %546 = vmatprep.subr.mxu0 0.0
    %547 = vmatpush1.msra.mxu0 0.0
    %548 = vmatprep.subr.mxu0 0.0
    %549 = vmatpush1.msra.mxu0 0.0
    %550 = vmatprep.subr.mxu0 0.0
    %551 = vmatpush1.msra.mxu0 0.0
    %552 = vmatprep.subr.mxu0 0.0
    %553 = vmatpush1.msra.mxu0 0.0
    %554 = vmatprep.subr.mxu0 0.0
    %555 = vmatpush1.msra.mxu0 0.0
    %556 = vmatprep.subr.mxu0 0.0
    %557 = vmatpush1.msra.mxu0 0.0
    %558 = vmatprep.subr.mxu0 0.0
    %559 = vmatpush1.msra.mxu0 0.0
    %560 = vmatprep.mubr.f32.mxu0 0.0
    %561 = vmatmul.mubr.f32.gmra.mrb[0].mxu0 %v494
    %v562 = vpop.f32.mrb[0].mxu0
    %v563 = vadd.f32 0.0, %v562
    %v564 = vpop.f32.mrb[0].mxu0
    %v565 = vadd.f32 0.0, %v564
    %566 = vdwg.mxu0
    %v567 = vadd.f32 %v489, %v563
    %v568 = vadd.f32 %v490, %v565
    %v569 = vxor.u32 %v567, 2147483648
    %v570 = vmul.f32 %v569, 1.442695
    %v571 = vpow.pop %v570
    %v572 = vadd.f32 %v571, 1.0
    %v573 = vrcp.pop %v572
    %v574 = vmul.f32 1.0, %v573
    %v575 = vtanh.pop %v568
    %v576 = vxor.u32 %v568, 2147483648
    %v577 = vmul.f32 %v576, 1.442695
    %v578 = vpow.pop %v577
    %v579 = vadd.f32 %v578, 1.0
    %v580 = vrcp.pop %v579
    %v581 = vmul.f32 1.0, %v580
    %v582 = vmul.f32 %v574, %v485
    %v583 = vmul.f32 %v574, %v575
    %585 = vrot.lane.b32.xlu0 %v583, 64
    %v586 = vpop.permute.xlu0 %585
    %v588 = vadd.f32 %v582, %v586
    %v589 = vtanh.pop %v588
    %v590 = vmul.f32 %v581, %v589
    %s591 = scalar_lea.vmem [#allocation2], 48
    %v592 = vld [vmem:[%s591] sm:$0xff]
    %v593 = vld [vmem:[%s591 + $0x8] sm:$0xff]
    %595 = vrot.lane.b32.xlu0 %v590, 64
    %v596 = vpop.permute.xlu0 %595
    %v597 = vsel %vm115, %v596, 0
    %599 = vmatprep.subr.mxu0 %v270
    %600 = vmatpush1.msra.mxu0 %v269
    %601 = vmatprep.subr.mxu0 %v272
    %602 = vmatpush1.msra.mxu0 %v271
    %603 = vmatprep.subr.mxu0 %v274
    %604 = vmatpush1.msra.mxu0 %v273
    %605 = vmatprep.subr.mxu0 %v276
    %606 = vmatpush1.msra.mxu0 %v275
    %607 = vmatprep.subr.mxu0 %v278
    %608 = vmatpush1.msra.mxu0 %v277
    %609 = vmatprep.subr.mxu0 %v280
    %610 = vmatpush1.msra.mxu0 %v279
    %611 = vmatprep.subr.mxu0 %v282
    %612 = vmatpush1.msra.mxu0 %v281
    %613 = vmatprep.subr.mxu0 %v284
    %614 = vmatpush1.msra.mxu0 %v283
    %615 = vmatprep.subr.mxu0 0.0
    %616 = vmatpush1.msra.mxu0 0.0
    %617 = vmatprep.subr.mxu0 0.0
    %618 = vmatpush1.msra.mxu0 0.0
    %619 = vmatprep.subr.mxu0 0.0
    %620 = vmatpush1.msra.mxu0 0.0
    %621 = vmatprep.subr.mxu0 0.0
    %622 = vmatpush1.msra.mxu0 0.0
    %623 = vmatprep.subr.mxu0 0.0
    %624 = vmatpush1.msra.mxu0 0.0
    %625 = vmatprep.subr.mxu0 0.0
    %626 = vmatpush1.msra.mxu0 0.0
    %627 = vmatprep.subr.mxu0 0.0
    %628 = vmatpush1.msra.mxu0 0.0
    %629 = vmatprep.subr.mxu0 0.0
    %630 = vmatpush1.msra.mxu0 0.0
    %631 = vmatprep.subr.mxu0 0.0
    %632 = vmatpush1.msra.mxu0 0.0
    %633 = vmatprep.subr.mxu0 0.0
    %634 = vmatpush1.msra.mxu0 0.0
    %635 = vmatprep.subr.mxu0 0.0
    %636 = vmatpush1.msra.mxu0 0.0
    %637 = vmatprep.subr.mxu0 0.0
    %638 = vmatpush1.msra.mxu0 0.0
    %639 = vmatprep.subr.mxu0 0.0
    %640 = vmatpush1.msra.mxu0 0.0
    %641 = vmatprep.subr.mxu0 0.0
    %642 = vmatpush1.msra.mxu0 0.0
    %643 = vmatprep.subr.mxu0 0.0
    %644 = vmatpush1.msra.mxu0 0.0
    %645 = vmatprep.subr.mxu0 0.0
    %646 = vmatpush1.msra.mxu0 0.0
    %647 = vmatprep.subr.mxu0 0.0
    %648 = vmatpush1.msra.mxu0 0.0
    %649 = vmatprep.subr.mxu0 0.0
    %650 = vmatpush1.msra.mxu0 0.0
    %651 = vmatprep.subr.mxu0 0.0
    %652 = vmatpush1.msra.mxu0 0.0
    %653 = vmatprep.subr.mxu0 0.0
    %654 = vmatpush1.msra.mxu0 0.0
    %655 = vmatprep.subr.mxu0 0.0
    %656 = vmatpush1.msra.mxu0 0.0
    %657 = vmatprep.subr.mxu0 0.0
    %658 = vmatpush1.msra.mxu0 0.0
    %659 = vmatprep.subr.mxu0 0.0
    %660 = vmatpush1.msra.mxu0 0.0
    %661 = vmatprep.subr.mxu0 0.0
    %662 = vmatpush1.msra.mxu0 0.0
    %663 = vmatprep.mubr.f32.mxu0 0.0
    %664 = vmatmul.mubr.f32.gmra.mrb[0].mxu0 %v597
    %v665 = vpop.f32.mrb[0].mxu0
    %v666 = vadd.f32 0.0, %v665
    %v667 = vpop.f32.mrb[0].mxu0
    %v668 = vadd.f32 0.0, %v667
    %669 = vdwg.mxu0
    %v670 = vadd.f32 %v592, %v666
    %v671 = vadd.f32 %v593, %v668
    %v672 = vxor.u32 %v670, 2147483648
    %v673 = vmul.f32 %v672, 1.442695
    %v674 = vpow.pop %v673
    %v675 = vadd.f32 %v674, 1.0
    %v676 = vrcp.pop %v675
    %v677 = vmul.f32 1.0, %v676
    %v678 = vtanh.pop %v671
    %v679 = vxor.u32 %v671, 2147483648
    %v680 = vmul.f32 %v679, 1.442695
    %v681 = vpow.pop %v680
    %v682 = vadd.f32 %v681, 1.0
    %v683 = vrcp.pop %v682
    %v684 = vmul.f32 1.0, %v683
    %v685 = vmul.f32 %v677, %v588
    %v686 = vmul.f32 %v677, %v678
    %688 = vrot.lane.b32.xlu0 %v686, 64
    %v689 = vpop.permute.xlu0 %688
    %v691 = vadd.f32 %v685, %v689
    %v692 = vtanh.pop %v691
    %v693 = vmul.f32 %v684, %v692
    %s694 = scalar_lea.vmem [#allocation2], 64
    %v695 = vld [vmem:[%s694] sm:$0xff]
    %v696 = vld [vmem:[%s694 + $0x8] sm:$0xff]
    %698 = vrot.lane.b32.xlu0 %v693, 64
    %v699 = vpop.permute.xlu0 %698
    %v700 = vsel %vm115, %v699, 0
    %702 = vmatprep.subr.mxu0 %v270
    %703 = vmatpush1.msra.mxu0 %v269
    %704 = vmatprep.subr.mxu0 %v272
    %705 = vmatpush1.msra.mxu0 %v271
    %706 = vmatprep.subr.mxu0 %v274
    %707 = vmatpush1.msra.mxu0 %v273
    %708 = vmatprep.subr.mxu0 %v276
    %709 = vmatpush1.msra.mxu0 %v275
    %710 = vmatprep.subr.mxu0 %v278
    %711 = vmatpush1.msra.mxu0 %v277
    %712 = vmatprep.subr.mxu0 %v280
    %713 = vmatpush1.msra.mxu0 %v279
    %714 = vmatprep.subr.mxu0 %v282
    %715 = vmatpush1.msra.mxu0 %v281
    %716 = vmatprep.subr.mxu0 %v284
    %717 = vmatpush1.msra.mxu0 %v283
    %718 = vmatprep.subr.mxu0 0.0
    %719 = vmatpush1.msra.mxu0 0.0
    %720 = vmatprep.subr.mxu0 0.0
    %721 = vmatpush1.msra.mxu0 0.0
    %722 = vmatprep.subr.mxu0 0.0
    %723 = vmatpush1.msra.mxu0 0.0
    %724 = vmatprep.subr.mxu0 0.0
    %725 = vmatpush1.msra.mxu0 0.0
    %726 = vmatprep.subr.mxu0 0.0
    %727 = vmatpush1.msra.mxu0 0.0
    %728 = vmatprep.subr.mxu0 0.0
    %729 = vmatpush1.msra.mxu0 0.0
    %730 = vmatprep.subr.mxu0 0.0
    %731 = vmatpush1.msra.mxu0 0.0
    %732 = vmatprep.subr.mxu0 0.0
    %733 = vmatpush1.msra.mxu0 0.0
    %734 = vmatprep.subr.mxu0 0.0
    %735 = vmatpush1.msra.mxu0 0.0
    %736 = vmatprep.subr.mxu0 0.0
    %737 = vmatpush1.msra.mxu0 0.0
    %738 = vmatprep.subr.mxu0 0.0
    %739 = vmatpush1.msra.mxu0 0.0
    %740 = vmatprep.subr.mxu0 0.0
    %741 = vmatpush1.msra.mxu0 0.0
    %742 = vmatprep.subr.mxu0 0.0
    %743 = vmatpush1.msra.mxu0 0.0
    %744 = vmatprep.subr.mxu0 0.0
    %745 = vmatpush1.msra.mxu0 0.0
    %746 = vmatprep.subr.mxu0 0.0
    %747 = vmatpush1.msra.mxu0 0.0
    %748 = vmatprep.subr.mxu0 0.0
    %749 = vmatpush1.msra.mxu0 0.0
    %750 = vmatprep.subr.mxu0 0.0
    %751 = vmatpush1.msra.mxu0 0.0
    %752 = vmatprep.subr.mxu0 0.0
    %753 = vmatpush1.msra.mxu0 0.0
    %754 = vmatprep.subr.mxu0 0.0
    %755 = vmatpush1.msra.mxu0 0.0
    %756 = vmatprep.subr.mxu0 0.0
    %757 = vmatpush1.msra.mxu0 0.0
    %758 = vmatprep.subr.mxu0 0.0
    %759 = vmatpush1.msra.mxu0 0.0
    %760 = vmatprep.subr.mxu0 0.0
    %761 = vmatpush1.msra.mxu0 0.0
    %762 = vmatprep.subr.mxu0 0.0
    %763 = vmatpush1.msra.mxu0 0.0
    %764 = vmatprep.subr.mxu0 0.0
    %765 = vmatpush1.msra.mxu0 0.0
    %766 = vmatprep.mubr.f32.mxu0 0.0
    %767 = vmatmul.mubr.f32.gmra.mrb[0].mxu0 %v700
    %v768 = vpop.f32.mrb[0].mxu0
    %v769 = vadd.f32 0.0, %v768
    %v770 = vpop.f32.mrb[0].mxu0
    %v771 = vadd.f32 0.0, %v770
    %772 = vdwg.mxu0
    %v773 = vadd.f32 %v695, %v769
    %v774 = vadd.f32 %v696, %v771
    %v775 = vxor.u32 %v773, 2147483648
    %v776 = vmul.f32 %v775, 1.442695
    %v777 = vpow.pop %v776
    %v778 = vadd.f32 %v777, 1.0
    %v779 = vrcp.pop %v778
    %v780 = vmul.f32 1.0, %v779
    %v781 = vtanh.pop %v774
    %v782 = vxor.u32 %v774, 2147483648
    %v783 = vmul.f32 %v782, 1.442695
    %v784 = vpow.pop %v783
    %v785 = vadd.f32 %v784, 1.0
    %v786 = vrcp.pop %v785
    %v787 = vmul.f32 1.0, %v786
    %v788 = vmul.f32 %v780, %v691
    %v789 = vmul.f32 %v780, %v781
    %791 = vrot.lane.b32.xlu0 %v789, 64
    %v792 = vpop.permute.xlu0 %791
    %v794 = vadd.f32 %v788, %v792
    %v795 = vtanh.pop %v794
    %v796 = vmul.f32 %v787, %v795
    %s797 = scalar_lea.vmem [#allocation2], 80
    %v798 = vld [vmem:[%s797] sm:$0xff]
    %v799 = vld [vmem:[%s797 + $0x8] sm:$0xff]
    %801 = vrot.lane.b32.xlu0 %v796, 64
    %v802 = vpop.permute.xlu0 %801
    %v803 = vsel %vm115, %v802, 0
    %805 = vmatprep.subr.mxu0 %v270
    %806 = vmatpush1.msra.mxu0 %v269
    %807 = vmatprep.subr.mxu0 %v272
    %808 = vmatpush1.msra.mxu0 %v271
    %809 = vmatprep.subr.mxu0 %v274
    %810 = vmatpush1.msra.mxu0 %v273
    %811 = vmatprep.subr.mxu0 %v276
    %812 = vmatpush1.msra.mxu0 %v275
    %813 = vmatprep.subr.mxu0 %v278
    %814 = vmatpush1.msra.mxu0 %v277
    %815 = vmatprep.subr.mxu0 %v280
    %816 = vmatpush1.msra.mxu0 %v279
    %817 = vmatprep.subr.mxu0 %v282
    %818 = vmatpush1.msra.mxu0 %v281
    %819 = vmatprep.subr.mxu0 %v284
    %820 = vmatpush1.msra.mxu0 %v283
    %821 = vmatprep.subr.mxu0 0.0
    %822 = vmatpush1.msra.mxu0 0.0
    %823 = vmatprep.subr.mxu0 0.0
    %824 = vmatpush1.msra.mxu0 0.0
    %825 = vmatprep.subr.mxu0 0.0
    %826 = vmatpush1.msra.mxu0 0.0
    %827 = vmatprep.subr.mxu0 0.0
    %828 = vmatpush1.msra.mxu0 0.0
    %829 = vmatprep.subr.mxu0 0.0
    %830 = vmatpush1.msra.mxu0 0.0
    %831 = vmatprep.subr.mxu0 0.0
    %832 = vmatpush1.msra.mxu0 0.0
    %833 = vmatprep.subr.mxu0 0.0
    %834 = vmatpush1.msra.mxu0 0.0
    %835 = vmatprep.subr.mxu0 0.0
    %836 = vmatpush1.msra.mxu0 0.0
    %837 = vmatprep.subr.mxu0 0.0
    %838 = vmatpush1.msra.mxu0 0.0
    %839 = vmatprep.subr.mxu0 0.0
    %840 = vmatpush1.msra.mxu0 0.0
    %841 = vmatprep.subr.mxu0 0.0
    %842 = vmatpush1.msra.mxu0 0.0
    %843 = vmatprep.subr.mxu0 0.0
    %844 = vmatpush1.msra.mxu0 0.0
    %845 = vmatprep.subr.mxu0 0.0
    %846 = vmatpush1.msra.mxu0 0.0
    %847 = vmatprep.subr.mxu0 0.0
    %848 = vmatpush1.msra.mxu0 0.0
    %849 = vmatprep.subr.mxu0 0.0
    %850 = vmatpush1.msra.mxu0 0.0
    %851 = vmatprep.subr.mxu0 0.0
    %852 = vmatpush1.msra.mxu0 0.0
    %853 = vmatprep.subr.mxu0 0.0
    %854 = vmatpush1.msra.mxu0 0.0
    %855 = vmatprep.subr.mxu0 0.0
    %856 = vmatpush1.msra.mxu0 0.0
    %857 = vmatprep.subr.mxu0 0.0
    %858 = vmatpush1.msra.mxu0 0.0
    %859 = vmatprep.subr.mxu0 0.0
    %860 = vmatpush1.msra.mxu0 0.0
    %861 = vmatprep.subr.mxu0 0.0
    %862 = vmatpush1.msra.mxu0 0.0
    %863 = vmatprep.subr.mxu0 0.0
    %864 = vmatpush1.msra.mxu0 0.0
    %865 = vmatprep.subr.mxu0 0.0
    %866 = vmatpush1.msra.mxu0 0.0
    %867 = vmatprep.subr.mxu0 0.0
    %868 = vmatpush1.msra.mxu0 0.0
    %869 = vmatprep.mubr.f32.mxu0 0.0
    %870 = vmatmul.mubr.f32.gmra.mrb[0].mxu0 %v803
    %v871 = vpop.f32.mrb[0].mxu0
    %v872 = vadd.f32 0.0, %v871
    %v873 = vpop.f32.mrb[0].mxu0
    %v874 = vadd.f32 0.0, %v873
    %875 = vdwg.mxu0
    %v876 = vadd.f32 %v798, %v872
    %v877 = vadd.f32 %v799, %v874
    %v878 = vxor.u32 %v876, 2147483648
    %v879 = vmul.f32 %v878, 1.442695
    %v880 = vpow.pop %v879
    %v881 = vadd.f32 %v880, 1.0
    %v882 = vrcp.pop %v881
    %v883 = vmul.f32 1.0, %v882
    %v884 = vtanh.pop %v877
    %v885 = vxor.u32 %v877, 2147483648
    %v886 = vmul.f32 %v885, 1.442695
    %v887 = vpow.pop %v886
    %v888 = vadd.f32 %v887, 1.0
    %v889 = vrcp.pop %v888
    %v890 = vmul.f32 1.0, %v889
    %v891 = vmul.f32 %v883, %v794
    %v892 = vmul.f32 %v883, %v884
    %894 = vrot.lane.b32.xlu0 %v892, 64
    %v895 = vpop.permute.xlu0 %894
    %v897 = vadd.f32 %v891, %v895
    %v898 = vtanh.pop %v897
    %v899 = vmul.f32 %v890, %v898
    %s900 = scalar_lea.vmem [#allocation2], 96
    %v901 = vld [vmem:[%s900] sm:$0xff]
    %v902 = vld [vmem:[%s900 + $0x8] sm:$0xff]
    %904 = vrot.lane.b32.xlu0 %v899, 64
    %v905 = vpop.permute.xlu0 %904
    %v906 = vsel %vm115, %v905, 0
    %908 = vmatprep.subr.mxu0 %v270
    %909 = vmatpush1.msra.mxu0 %v269
    %910 = vmatprep.subr.mxu0 %v272
    %911 = vmatpush1.msra.mxu0 %v271
    %912 = vmatprep.subr.mxu0 %v274
    %913 = vmatpush1.msra.mxu0 %v273
    %914 = vmatprep.subr.mxu0 %v276
    %915 = vmatpush1.msra.mxu0 %v275
    %916 = vmatprep.subr.mxu0 %v278
    %917 = vmatpush1.msra.mxu0 %v277
    %918 = vmatprep.subr.mxu0 %v280
    %919 = vmatpush1.msra.mxu0 %v279
    %920 = vmatprep.subr.mxu0 %v282
    %921 = vmatpush1.msra.mxu0 %v281
    %922 = vmatprep.subr.mxu0 %v284
    %923 = vmatpush1.msra.mxu0 %v283
    %924 = vmatprep.subr.mxu0 0.0
    %925 = vmatpush1.msra.mxu0 0.0
    %926 = vmatprep.subr.mxu0 0.0
    %927 = vmatpush1.msra.mxu0 0.0
    %928 = vmatprep.subr.mxu0 0.0
    %929 = vmatpush1.msra.mxu0 0.0
    %930 = vmatprep.subr.mxu0 0.0
    %931 = vmatpush1.msra.mxu0 0.0
    %932 = vmatprep.subr.mxu0 0.0
    %933 = vmatpush1.msra.mxu0 0.0
    %934 = vmatprep.subr.mxu0 0.0
    %935 = vmatpush1.msra.mxu0 0.0
    %936 = vmatprep.subr.mxu0 0.0
    %937 = vmatpush1.msra.mxu0 0.0
    %938 = vmatprep.subr.mxu0 0.0
    %939 = vmatpush1.msra.mxu0 0.0
    %940 = vmatprep.subr.mxu0 0.0
    %941 = vmatpush1.msra.mxu0 0.0
    %942 = vmatprep.subr.mxu0 0.0
    %943 = vmatpush1.msra.mxu0 0.0
    %944 = vmatprep.subr.mxu0 0.0
    %945 = vmatpush1.msra.mxu0 0.0
    %946 = vmatprep.subr.mxu0 0.0
    %947 = vmatpush1.msra.mxu0 0.0
    %948 = vmatprep.subr.mxu0 0.0
    %949 = vmatpush1.msra.mxu0 0.0
    %950 = vmatprep.subr.mxu0 0.0
    %951 = vmatpush1.msra.mxu0 0.0
    %952 = vmatprep.subr.mxu0 0.0
    %953 = vmatpush1.msra.mxu0 0.0
    %954 = vmatprep.subr.mxu0 0.0
    %955 = vmatpush1.msra.mxu0 0.0
    %956 = vmatprep.subr.mxu0 0.0
    %957 = vmatpush1.msra.mxu0 0.0
    %958 = vmatprep.subr.mxu0 0.0
    %959 = vmatpush1.msra.mxu0 0.0
    %960 = vmatprep.subr.mxu0 0.0
    %961 = vmatpush1.msra.mxu0 0.0
    %962 = vmatprep.subr.mxu0 0.0
    %963 = vmatpush1.msra.mxu0 0.0
    %964 = vmatprep.subr.mxu0 0.0
    %965 = vmatpush1.msra.mxu0 0.0
    %966 = vmatprep.subr.mxu0 0.0
    %967 = vmatpush1.msra.mxu0 0.0
    %968 = vmatprep.subr.mxu0 0.0
    %969 = vmatpush1.msra.mxu0 0.0
    %970 = vmatprep.subr.mxu0 0.0
    %971 = vmatpush1.msra.mxu0 0.0
    %972 = vmatprep.mubr.f32.mxu0 0.0
    %973 = vmatmul.mubr.f32.gmra.mrb[0].mxu0 %v906
    %v974 = vpop.f32.mrb[0].mxu0
    %v975 = vadd.f32 0.0, %v974
    %v976 = vpop.f32.mrb[0].mxu0
    %v977 = vadd.f32 0.0, %v976
    %978 = vdwg.mxu0
    %v979 = vadd.f32 %v901, %v975
    %v980 = vadd.f32 %v902, %v977
    %v981 = vxor.u32 %v979, 2147483648
    %v982 = vmul.f32 %v981, 1.442695
    %v983 = vpow.pop %v982
    %v984 = vadd.f32 %v983, 1.0
    %v985 = vrcp.pop %v984
    %v986 = vmul.f32 1.0, %v985
    %v987 = vtanh.pop %v980
    %v988 = vxor.u32 %v980, 2147483648
    %v989 = vmul.f32 %v988, 1.442695
    %v990 = vpow.pop %v989
    %v991 = vadd.f32 %v990, 1.0
    %v992 = vrcp.pop %v991
    %v993 = vmul.f32 1.0, %v992
    %v994 = vmul.f32 %v986, %v897
    %v995 = vmul.f32 %v986, %v987
    %997 = vrot.lane.b32.xlu0 %v995, 64
    %v998 = vpop.permute.xlu0 %997
    %v1000 = vadd.f32 %v994, %v998
    %v1001 = vtanh.pop %v1000
    %v1002 = vmul.f32 %v993, %v1001
    %s1003 = scalar_lea.vmem [#allocation2], 112
    %v1004 = vld [vmem:[%s1003] sm:$0xff]
    %v1005 = vld [vmem:[%s1003 + $0x8] sm:$0xff]
    %1007 = vrot.lane.b32.xlu0 %v1002, 64
    %v1008 = vpop.permute.xlu0 %1007
    %v1009 = vsel %vm115, %v1008, 0
    %1011 = vmatprep.subr.mxu0 %v270
    %1012 = vmatpush1.msra.mxu0 %v269
    %1013 = vmatprep.subr.mxu0 %v272
    %1014 = vmatpush1.msra.mxu0 %v271
    %1015 = vmatprep.subr.mxu0 %v274
    %1016 = vmatpush1.msra.mxu0 %v273
    %1017 = vmatprep.subr.mxu0 %v276
    %1018 = vmatpush1.msra.mxu0 %v275
    %1019 = vmatprep.subr.mxu0 %v278
    %1020 = vmatpush1.msra.mxu0 %v277
    %1021 = vmatprep.subr.mxu0 %v280
    %1022 = vmatpush1.msra.mxu0 %v279
    %1023 = vmatprep.subr.mxu0 %v282
    %1024 = vmatpush1.msra.mxu0 %v281
    %1025 = vmatprep.subr.mxu0 %v284
    %1026 = vmatpush1.msra.mxu0 %v283
    %1027 = vmatprep.subr.mxu0 0.0
    %1028 = vmatpush1.msra.mxu0 0.0
    %1029 = vmatprep.subr.mxu0 0.0
    %1030 = vmatpush1.msra.mxu0 0.0
    %1031 = vmatprep.subr.mxu0 0.0
    %1032 = vmatpush1.msra.mxu0 0.0
    %1033 = vmatprep.subr.mxu0 0.0
    %1034 = vmatpush1.msra.mxu0 0.0
    %1035 = vmatprep.subr.mxu0 0.0
    %1036 = vmatpush1.msra.mxu0 0.0
    %1037 = vmatprep.subr.mxu0 0.0
    %1038 = vmatpush1.msra.mxu0 0.0
    %1039 = vmatprep.subr.mxu0 0.0
    %1040 = vmatpush1.msra.mxu0 0.0
    %1041 = vmatprep.subr.mxu0 0.0
    %1042 = vmatpush1.msra.mxu0 0.0
    %1043 = vmatprep.subr.mxu0 0.0
    %1044 = vmatpush1.msra.mxu0 0.0
    %1045 = vmatprep.subr.mxu0 0.0
    %1046 = vmatpush1.msra.mxu0 0.0
    %1047 = vmatprep.subr.mxu0 0.0
    %1048 = vmatpush1.msra.mxu0 0.0
    %1049 = vmatprep.subr.mxu0 0.0
    %1050 = vmatpush1.msra.mxu0 0.0
    %1051 = vmatprep.subr.mxu0 0.0
    %1052 = vmatpush1.msra.mxu0 0.0
    %1053 = vmatprep.subr.mxu0 0.0
    %1054 = vmatpush1.msra.mxu0 0.0
    %1055 = vmatprep.subr.mxu0 0.0
    %1056 = vmatpush1.msra.mxu0 0.0
    %1057 = vmatprep.subr.mxu0 0.0
    %1058 = vmatpush1.msra.mxu0 0.0
    %1059 = vmatprep.subr.mxu0 0.0
    %1060 = vmatpush1.msra.mxu0 0.0
    %1061 = vmatprep.subr.mxu0 0.0
    %1062 = vmatpush1.msra.mxu0 0.0
    %1063 = vmatprep.subr.mxu0 0.0
    %1064 = vmatpush1.msra.mxu0 0.0
    %1065 = vmatprep.subr.mxu0 0.0
    %1066 = vmatpush1.msra.mxu0 0.0
    %1067 = vmatprep.subr.mxu0 0.0
    %1068 = vmatpush1.msra.mxu0 0.0
    %1069 = vmatprep.subr.mxu0 0.0
    %1070 = vmatpush1.msra.mxu0 0.0
    %1071 = vmatprep.subr.mxu0 0.0
    %1072 = vmatpush1.msra.mxu0 0.0
    %1073 = vmatprep.subr.mxu0 0.0
    %1074 = vmatpush1.msra.mxu0 0.0
    %1075 = vmatprep.mubr.f32.mxu0 0.0
    %1076 = vmatmul.mubr.f32.gmra.mrb[0].mxu0 %v1009
    %v1077 = vpop.f32.mrb[0].mxu0
    %v1078 = vadd.f32 0.0, %v1077
    %v1079 = vpop.f32.mrb[0].mxu0
    %v1080 = vadd.f32 0.0, %v1079
    %1081 = vdwg.mxu0
    %v1082 = vadd.f32 %v1004, %v1078
    %v1083 = vadd.f32 %v1005, %v1080
    %v1084 = vxor.u32 %v1082, 2147483648
    %v1085 = vmul.f32 %v1084, 1.442695
    %v1086 = vpow.pop %v1085
    %v1087 = vadd.f32 %v1086, 1.0
    %v1088 = vrcp.pop %v1087
    %v1089 = vmul.f32 1.0, %v1088
    %v1090 = vtanh.pop %v1083
    %v1091 = vxor.u32 %v1083, 2147483648
    %v1092 = vmul.f32 %v1091, 1.442695
    %v1093 = vpow.pop %v1092
    %v1094 = vadd.f32 %v1093, 1.0
    %v1095 = vrcp.pop %v1094
    %v1096 = vmul.f32 1.0, %v1095
    %v1097 = vmul.f32 %v1089, %v1000
    %v1098 = vmul.f32 %v1089, %v1090
    %1100 = vrot.lane.b32.xlu0 %v1098, 64
    %v1101 = vpop.permute.xlu0 %1100
    %v1103 = vadd.f32 %v1097, %v1101
    %v1104 = vtanh.pop %v1103
    %v1105 = vmul.f32 %v1096, %v1104
    %v1106 = vld [vmem:[#allocation9] sm:$0xff]
    %v1107 = vld [vmem:[#allocation9 + $0x8] sm:$0xff]
    %v1108 = vld [vmem:[#allocation9 + $0x10] sm:$0xff]
    %v1109 = vld [vmem:[#allocation9 + $0x18] sm:$0xff]
    %v1110 = vld [vmem:[#allocation9 + $0x20] sm:$0xff]
    %v1111 = vld [vmem:[#allocation9 + $0x28] sm:$0xff]
    %v1112 = vld [vmem:[#allocation9 + $0x30] sm:$0xff]
    %v1113 = vld [vmem:[#allocation9 + $0x38] sm:$0xff]
    %v1114 = vld [vmem:[%s5] sm:$0x1]
    %v1116 = vlaneseq
    %v1117 = vshrl.u32 %v1116, 7
    %v1118 = vsub.s32 0, %v1117
    %v1119 = vrot.slane %v1114, %v1118
    %1122 = vrot.lane.b32.xlu0 %v1105, 64
    %v1123 = vpop.permute.xlu0 %1122
    %v1124 = vsel %vm115, %v1123, 0
    %1126 = vmatprep.subr.mxu0 0.0
    %1127 = vmatpush1.msra.mxu0 %v1106
    %1128 = vmatprep.subr.mxu0 0.0
    %1129 = vmatpush1.msra.mxu0 %v1107
    %1130 = vmatprep.subr.mxu0 0.0
    %1131 = vmatpush1.msra.mxu0 %v1108
    %1132 = vmatprep.subr.mxu0 0.0
    %1133 = vmatpush1.msra.mxu0 %v1109
    %1134 = vmatprep.subr.mxu0 0.0
    %1135 = vmatpush1.msra.mxu0 %v1110
    %1136 = vmatprep.subr.mxu0 0.0
    %1137 = vmatpush1.msra.mxu0 %v1111
    %1138 = vmatprep.subr.mxu0 0.0
    %1139 = vmatpush1.msra.mxu0 %v1112
    %1140 = vmatprep.subr.mxu0 0.0
    %1141 = vmatpush1.msra.mxu0 %v1113
    %1142 = vmatprep.subr.mxu0 0.0
    %1143 = vmatpush1.msra.mxu0 0.0
    %1144 = vmatprep.subr.mxu0 0.0
    %1145 = vmatpush1.msra.mxu0 0.0
    %1146 = vmatprep.subr.mxu0 0.0
    %1147 = vmatpush1.msra.mxu0 0.0
    %1148 = vmatprep.subr.mxu0 0.0
    %1149 = vmatpush1.msra.mxu0 0.0
    %1150 = vmatprep.subr.mxu0 0.0
    %1151 = vmatpush1.msra.mxu0 0.0
    %1152 = vmatprep.subr.mxu0 0.0
    %1153 = vmatpush1.msra.mxu0 0.0
    %1154 = vmatprep.subr.mxu0 0.0
    %1155 = vmatpush1.msra.mxu0 0.0
    %1156 = vmatprep.subr.mxu0 0.0
    %1157 = vmatpush1.msra.mxu0 0.0
    %1158 = vmatprep.subr.mxu0 0.0
    %1159 = vmatpush1.msra.mxu0 0.0
    %1160 = vmatprep.subr.mxu0 0.0
    %1161 = vmatpush1.msra.mxu0 0.0
    %1162 = vmatprep.subr.mxu0 0.0
    %1163 = vmatpush1.msra.mxu0 0.0
    %1164 = vmatprep.subr.mxu0 0.0
    %1165 = vmatpush1.msra.mxu0 0.0
    %1166 = vmatprep.subr.mxu0 0.0
    %1167 = vmatpush1.msra.mxu0 0.0
    %1168 = vmatprep.subr.mxu0 0.0
    %1169 = vmatpush1.msra.mxu0 0.0
    %1170 = vmatprep.subr.mxu0 0.0
    %1171 = vmatpush1.msra.mxu0 0.0
    %1172 = vmatprep.subr.mxu0 0.0
    %1173 = vmatpush1.msra.mxu0 0.0
    %1174 = vmatprep.subr.mxu0 0.0
    %1175 = vmatpush1.msra.mxu0 0.0
    %1176 = vmatprep.subr.mxu0 0.0
    %1177 = vmatpush1.msra.mxu0 0.0
    %1178 = vmatprep.subr.mxu0 0.0
    %1179 = vmatpush1.msra.mxu0 0.0
    %1180 = vmatprep.subr.mxu0 0.0
    %1181 = vmatpush1.msra.mxu0 0.0
    %1182 = vmatprep.subr.mxu0 0.0
    %1183 = vmatpush1.msra.mxu0 0.0
    %1184 = vmatprep.subr.mxu0 0.0
    %1185 = vmatpush1.msra.mxu0 0.0
    %1186 = vmatprep.subr.mxu0 0.0
    %1187 = vmatpush1.msra.mxu0 0.0
    %1188 = vmatprep.subr.mxu0 0.0
    %1189 = vmatpush1.msra.mxu0 0.0
    %1190 = vmatprep.mubr.f32.mxu0 0.0
    %1191 = vmatmul.mubr.f32.gmra.mrb[0].mxu0 %v1124
    %v1192 = vpop.f32.mrb[0].mxu0
    %v1193 = vadd.f32 %v1119, %v1192
    %v1194 = vpop.f32.mrb[0].mxu0
    %1195 = vdwg.mxu0
    %1196 = vst [vmem:[#allocation11] sm:$0xff] %v1193
    // Predicated region
    $region42: #{tpu_custom_call.1} parent=1 // pred_check
      _
    $region43: #{tpu_custom_call.1} parent=1 // pred_check_branch
      %1198 = sbr.rel (0) target = $region45
    $region44: #{tpu_custom_call.1} parent=1 // pred_region
      %s1200 = ssub.s32 128, 128
      %1201 = vsyncadd [#allocation5], %s1200
      %s1203 = sshll.u32 [#allocation11], 4
      %s1204 = int_to_ptr.vmem [resolvable:$true] %s1203
      %1206 = dma.vmem_to_hbm [thread:$0]  %s1204, 128, %s6, [#allocation5]
    $region45: #{tpu_custom_call.1} parent=1 // pred_fallthru
      _
    // Predicated region
    $region46: #{tpu_custom_call.1} parent=1 // pred_check
      _
    $region47: #{tpu_custom_call.1} parent=1 // pred_check_branch
      %1208 = sbr.rel (0) target = $region49
    $region48: #{tpu_custom_call.1} parent=1 // pred_region
      %1209 = dma.done [#allocation5], 128
    $region49: #{tpu_custom_call.1} parent=1 // pred_fallthru
      _
    %1210 = vsyncpa [#allocation4], 1
    %1211 = vsyncpa [#allocation7], 1
    %1212 = vsyncpa [#allocation10], 1
    %1213 = vsyncpa [#allocation5], 1

</llo_original>
